<compile_context>
chip_gen: v6e
topology: v6e:2x2x1
jax: 0.10.0
libtpu: 0.0.40
codegen_flags: <defaults>
</compile_context>

<pallas_src>
import functools
import math

import jax
import jax.numpy as jnp
from jax import lax
from jax.experimental import pallas as pl
from jax.experimental.pallas import tpu as pltpu


# ------------------------------- Pallas kernel ------------------------------ #

def _mha_kernel(q_ref, k_ref, v_ref, m_ref,
                wq_ref, bq_ref, wk_ref, bk_ref, wv_ref, bv_ref, wo_ref, bo_ref,
                o_ref, *, num_heads, scale):
    """Fused multi-head attention for one batch element.

    q_ref: (1, Lq, D) bf16     k_ref/v_ref: (1, Lk, D) bf16
    m_ref: (1, Lq, Lk) f32 (0 == masked out)
    w*_ref: (D, D) bf16        b*_ref: (1, D) f32
    o_ref: (1, Lq, D) f32  (lane-dense last dim)
    """
    H = num_heads
    D = q_ref.shape[-1]
    Lq = q_ref.shape[1]
    dh = D // H

    x_q = q_ref[0]                      # (Lq, D) bf16
    x_k = k_ref[0]                      # (Lk, D) bf16
    x_v = v_ref[0]                      # (Lk, D) bf16

    # Additive mask bias, computed once per batch element (f32).
    mask_bias = jnp.where(m_ref[0] == 0.0,
                          jnp.float32(-1e9), jnp.float32(0.0))   # (Lq, Lk)

    # Fused input projections (MXU, bf16 operands, f32 accumulation + f32 bias).
    # The 1/sqrt(d_k) scale is folded into Q here, once.
    q_proj = (jnp.dot(x_q, wq_ref[...], preferred_element_type=jnp.float32)
              + bq_ref[...]) * scale
    k_proj = jnp.dot(x_k, wk_ref[...], preferred_element_type=jnp.float32) + bk_ref[...]
    v_proj = jnp.dot(x_v, wv_ref[...], preferred_element_type=jnp.float32) + bv_ref[...]

    # Contract over the last dim of both operands: no k.T relayout needed.
    dim_nums = (((1,), (1,)), ((), ()))

    # f32 output accumulator: bias + sum_h ctx_h @ Wo[h*dh:(h+1)*dh, :].
    # (broadcast hoisted out of the head loop.)
    out = jnp.broadcast_to(bo_ref[...], (Lq, D)).astype(jnp.float32)

    for h in range(H):                  # static unroll over heads (VMEM-local)
        sl = slice(h * dh, (h + 1) * dh)
        qh = q_proj[:, sl].astype(jnp.bfloat16)     # (Lq, dh)
        kh = k_proj[:, sl].astype(jnp.bfloat16)     # (Lk, dh)
        vh = v_proj[:, sl].astype(jnp.bfloat16)     # (Lk, dh)

        s = lax.dot_general(qh, kh, dim_nums,
                            preferred_element_type=jnp.float32)    # (Lq, Lk)
        s = s + mask_bias                               # masked_fill(mask==0, -1e9)
        s = s - jnp.max(s, axis=-1, keepdims=True)      # f32 softmax
        p = jnp.exp(s)
        p = p * pl.reciprocal(jnp.sum(p, axis=-1, keepdims=True), approx=True)

        ctx_h = jnp.dot(p.astype(jnp.bfloat16), vh,
                        preferred_element_type=jnp.float32)         # (Lq, dh)
        # Fused output projection: accumulate this head's contribution.
        out = out + jnp.dot(ctx_h.astype(jnp.bfloat16), wo_ref[sl, :],
                            preferred_element_type=jnp.float32)     # (Lq, D)

    o_ref[0] = out.astype(o_ref.dtype)


# --------------------------------- wrapper ---------------------------------- #

def multi_headed_attention(query, key, value, mask, params, num_heads):
    """query:[B,Lq,D]  key/value:[B,Lk,D]  mask:[B,Lq,Lk] or [B,1,Lk] or None."""
    B, Lq, D = query.shape
    Lk = key.shape[1]
    assert D % num_heads == 0
    scale = 1.0 / math.sqrt(D // num_heads)

    if mask is None:
        mask = jnp.ones((B, Lq, Lk), jnp.float32)
    mask = jnp.broadcast_to(mask.astype(jnp.float32), (B, Lq, Lk))

    bf = jnp.bfloat16
    q = query.astype(bf)
    k = key.astype(bf)
    v = value.astype(bf)
    wq = params["wq"].astype(bf)
    wk = params["wk"].astype(bf)
    wv = params["wv"].astype(bf)
    wo = params["wo"].astype(bf)
    bq = params["bq"].reshape(1, D).astype(jnp.float32)
    bk = params["bk"].reshape(1, D).astype(jnp.float32)
    bv = params["bv"].reshape(1, D).astype(jnp.float32)
    bo = params["bo"].reshape(1, D).astype(jnp.float32)

    kernel = functools.partial(_mha_kernel, num_heads=num_heads, scale=scale)

    seq_spec_q = pl.BlockSpec((1, Lq, D), lambda b: (b, 0, 0))
    seq_spec_k = pl.BlockSpec((1, Lk, D), lambda b: (b, 0, 0))
    mask_spec = pl.BlockSpec((1, Lq, Lk), lambda b: (b, 0, 0))
    w_spec = pl.BlockSpec((D, D), lambda b: (0, 0))      # reused across the grid
    b_spec = pl.BlockSpec((1, D), lambda b: (0, 0))

    return pl.pallas_call(
        kernel,
        grid=(B,),
        in_specs=[
            seq_spec_q, seq_spec_k, seq_spec_k, mask_spec,
            w_spec, b_spec,   # wq, bq
            w_spec, b_spec,   # wk, bk
            w_spec, b_spec,   # wv, bv
            w_spec, b_spec,   # wo, bo
        ],
        out_specs=pl.BlockSpec((1, Lq, D), lambda b: (b, 0, 0)),
        out_shape=jax.ShapeDtypeStruct((B, Lq, D), jnp.float32),
        compiler_params=pltpu.CompilerParams(
            dimension_semantics=("parallel",)),
    )(q, k, v, mask, wq, bq, wk, bk, wv, bv, wo, bo)


# --------------------------- reference (pure JAX) ---------------------------- #

def reference_mha(query, key, value, mask, p, num_heads):
    B, Lq, D = query.shape
    Lk = key.shape[1]
    dh = D // num_heads

    def lin(x, w, b):
        return x @ w + b

    def split(t, L):
        return t.reshape(B, L, num_heads, dh).transpose(0, 2, 1, 3)

    Q = split(lin(query, p["wq"], p["bq"]), Lq)
    K = split(lin(key, p["wk"], p["bk"]), Lk)
    V = split(lin(value, p["wv"], p["bv"]), Lk)
    s = jnp.einsum("bhqd,bhkd->bhqk", Q, K) / math.sqrt(dh)
    s = jnp.where(mask[:, None, :, :] == 0, -1e9, s)
    p_attn = jax.nn.softmax(s, axis=-1)
    ctx = jnp.einsum("bhqk,bhkd->bhqd", p_attn, V)
    ctx = ctx.transpose(0, 2, 1, 3).reshape(B, Lq, D)
    return ctx @ p["wo"] + p["bo"]


# ------------------------------- param init ---------------------------------- #

def init_params(key, D):
    def dense(k, din, dout):
        k1, k2 = jax.random.split(k)
        s = 1.0 / math.sqrt(din)
        w = jax.random.uniform(k1, (din, dout), jnp.float32, -s, s)
        b = jax.random.uniform(k2, (dout,), jnp.float32, -s, s)
        return w, b

    kq, kk, kv, ko = jax.random.split(key, 4)
    wq, bq = dense(kq, D, D)
    wk, bk = dense(kk, D, D)
    wv, bv = dense(kv, D, D)
    wo, bo = dense(ko, D, D)
    return dict(wq=wq, bq=bq, wk=wk, bk=bk, wv=wv, bv=bv, wo=wo, bo=bo)


# ----------------------------------- main ------------------------------------ #

if __name__ == "__main__":
    B, Lq, Lk, D, H = 2, 8, 8, 32, 4

    root = jax.random.PRNGKey(0)
    kq, kk, kv, kp = jax.random.split(root, 4)
    query = jax.random.normal(kq, (B, Lq, D), jnp.float32)
    key = jax.random.normal(kk, (B, Lk, D), jnp.float32)
    value = jax.random.normal(kv, (B, Lk, D), jnp.float32)

    # mask: 1 = attend, 0 = masked; mask the last two key positions of batch 1.
    mask = jnp.ones((B, Lq, Lk), jnp.float32)
    mask = mask.at[1, :, -2:].set(0.0)

    params = init_params(kp, D)

    out = multi_headed_attention(query, key, value, mask, params, H)
    out = jax.block_until_ready(out)

    ref = reference_mha(query, key, value, mask, params, H)
    err = float(jnp.max(jnp.abs(out - ref)))

    assert out.shape == (B, Lq, D)
    assert jnp.all(jnp.isfinite(out))
    assert err < 0.1, f"max abs error vs f32 reference too large: {err}"
    print("KERNEL_OK")
</pallas_src>

<mosaic_0001>
module attributes {stable_mosaic.version = 11 : i64} {
  func.func @_mha_kernel(%arg0: i32, %arg1: memref<1x8x32xbf16, #tpu.memory_space<vmem>>, %arg2: memref<1x8x32xbf16, #tpu.memory_space<vmem>>, %arg3: memref<1x8x32xbf16, #tpu.memory_space<vmem>>, %arg4: memref<1x8x8xf32, #tpu.memory_space<vmem>>, %arg5: memref<32x32xbf16, #tpu.memory_space<vmem>>, %arg6: memref<1x32xf32, #tpu.memory_space<vmem>>, %arg7: memref<32x32xbf16, #tpu.memory_space<vmem>>, %arg8: memref<1x32xf32, #tpu.memory_space<vmem>>, %arg9: memref<32x32xbf16, #tpu.memory_space<vmem>>, %arg10: memref<1x32xf32, #tpu.memory_space<vmem>>, %arg11: memref<32x32xbf16, #tpu.memory_space<vmem>>, %arg12: memref<1x32xf32, #tpu.memory_space<vmem>>, %arg13: memref<1x8x32xf32, #tpu.memory_space<vmem>>) attributes {dimension_semantics = [#tpu.dimension_semantics<parallel>], iteration_bounds = array<i64: 2>, scalar_prefetch = 0 : i64, scratch_operands = 0 : i64, tpu.core_type = #tpu.core_type<tc>, window_params = [{transform_indices = @transform_0, window_bounds = array<i64: 1, 8, 32>}, {transform_indices = @transform_1, window_bounds = array<i64: 1, 8, 32>}, {transform_indices = @transform_2, window_bounds = array<i64: 1, 8, 32>}, {transform_indices = @transform_3, window_bounds = array<i64: 1, 8, 8>}, {pipeline_mode = #tpu.pipeline_mode<synchronous>, transform_indices = @transform_4, window_bounds = array<i64: 32, 32>}, {pipeline_mode = #tpu.pipeline_mode<synchronous>, transform_indices = @transform_5, window_bounds = array<i64: 1, 32>}, {pipeline_mode = #tpu.pipeline_mode<synchronous>, transform_indices = @transform_6, window_bounds = array<i64: 32, 32>}, {pipeline_mode = #tpu.pipeline_mode<synchronous>, transform_indices = @transform_7, window_bounds = array<i64: 1, 32>}, {pipeline_mode = #tpu.pipeline_mode<synchronous>, transform_indices = @transform_8, window_bounds = array<i64: 32, 32>}, {pipeline_mode = #tpu.pipeline_mode<synchronous>, transform_indices = @transform_9, window_bounds = array<i64: 1, 32>}, {pipeline_mode = #tpu.pipeline_mode<synchronous>, transform_indices = @transform_10, window_bounds = array<i64: 32, 32>}, {pipeline_mode = #tpu.pipeline_mode<synchronous>, transform_indices = @transform_11, window_bounds = array<i64: 1, 32>}, {transform_indices = @transform_12, window_bounds = array<i64: 1, 8, 32>}]} {
    %c0 = arith.constant 0 : index
    %c0_0 = arith.constant 0 : index
    %c0_1 = arith.constant 0 : index
    %0 = vector.load %arg1[%c0, %c0_0, %c0_1] : memref<1x8x32xbf16, #tpu.memory_space<vmem>>, vector<1x8x32xbf16>
    %1 = vector.shape_cast %0 : vector<1x8x32xbf16> to vector<8x32xbf16>
    %c0_2 = arith.constant 0 : index
    %c0_3 = arith.constant 0 : index
    %c0_4 = arith.constant 0 : index
    %2 = vector.load %arg2[%c0_2, %c0_3, %c0_4] : memref<1x8x32xbf16, #tpu.memory_space<vmem>>, vector<1x8x32xbf16>
    %3 = vector.shape_cast %2 : vector<1x8x32xbf16> to vector<8x32xbf16>
    %c0_5 = arith.constant 0 : index
    %c0_6 = arith.constant 0 : index
    %c0_7 = arith.constant 0 : index
    %4 = vector.load %arg3[%c0_5, %c0_6, %c0_7] : memref<1x8x32xbf16, #tpu.memory_space<vmem>>, vector<1x8x32xbf16>
    %5 = vector.shape_cast %4 : vector<1x8x32xbf16> to vector<8x32xbf16>
    %c0_8 = arith.constant 0 : index
    %c0_9 = arith.constant 0 : index
    %c0_10 = arith.constant 0 : index
    %6 = vector.load %arg4[%c0_8, %c0_9, %c0_10] : memref<1x8x8xf32, #tpu.memory_space<vmem>>, vector<1x8x8xf32>
    %7 = vector.shape_cast %6 : vector<1x8x8xf32> to vector<8x8xf32>
    %cst = arith.constant 0.000000e+00 : f32
    %8 = vector.broadcast %cst : f32 to vector<8x8xf32>
    %9 = arith.cmpf oeq, %7, %8 : vector<8x8xf32>
    %cst_11 = arith.constant -1.000000e+09 : f32
    %cst_12 = arith.constant 0.000000e+00 : f32
    %10 = vector.broadcast %cst_11 : f32 to vector<8x8xf32>
    %11 = vector.broadcast %cst_12 : f32 to vector<8x8xf32>
    %12 = arith.select %9, %10, %11 : vector<8x8xi1>, vector<8x8xf32>
    %c0_13 = arith.constant 0 : index
    %c0_14 = arith.constant 0 : index
    %13 = vector.load %arg5[%c0_13, %c0_14] : memref<32x32xbf16, #tpu.memory_space<vmem>>, vector<32x32xbf16>
    %cst_15 = arith.constant dense<0.000000e+00> : vector<8x32xf32>
    %14 = tpu.matmul %1, %13, %cst_15 {dimension_numbers = #tpu.dot_dimension_numbers<[1], [0], [0], [1], [0, 0, 1, 1], [], []>} : vector<8x32xbf16>, vector<32x32xbf16>, vector<8x32xf32> -> vector<8x32xf32>
    %c0_16 = arith.constant 0 : index
    %c0_17 = arith.constant 0 : index
    %15 = vector.load %arg6[%c0_16, %c0_17] : memref<1x32xf32, #tpu.memory_space<vmem>>, vector<1x32xf32>
    %16 = vector.broadcast %15 : vector<1x32xf32> to vector<8x32xf32>
    %17 = arith.addf %14, %16 : vector<8x32xf32>
    %cst_18 = arith.constant 0.353553385 : f32
    %18 = vector.broadcast %cst_18 : f32 to vector<8x32xf32>
    %19 = arith.mulf %17, %18 : vector<8x32xf32>
    %c0_19 = arith.constant 0 : index
    %c0_20 = arith.constant 0 : index
    %20 = vector.load %arg7[%c0_19, %c0_20] : memref<32x32xbf16, #tpu.memory_space<vmem>>, vector<32x32xbf16>
    %cst_21 = arith.constant dense<0.000000e+00> : vector<8x32xf32>
    %21 = tpu.matmul %3, %20, %cst_21 {dimension_numbers = #tpu.dot_dimension_numbers<[1], [0], [0], [1], [0, 0, 1, 1], [], []>} : vector<8x32xbf16>, vector<32x32xbf16>, vector<8x32xf32> -> vector<8x32xf32>
    %c0_22 = arith.constant 0 : index
    %c0_23 = arith.constant 0 : index
    %22 = vector.load %arg8[%c0_22, %c0_23] : memref<1x32xf32, #tpu.memory_space<vmem>>, vector<1x32xf32>
    %23 = vector.broadcast %22 : vector<1x32xf32> to vector<8x32xf32>
    %24 = arith.addf %21, %23 : vector<8x32xf32>
    %c0_24 = arith.constant 0 : index
    %c0_25 = arith.constant 0 : index
    %25 = vector.load %arg9[%c0_24, %c0_25] : memref<32x32xbf16, #tpu.memory_space<vmem>>, vector<32x32xbf16>
    %cst_26 = arith.constant dense<0.000000e+00> : vector<8x32xf32>
    %26 = tpu.matmul %5, %25, %cst_26 {dimension_numbers = #tpu.dot_dimension_numbers<[1], [0], [0], [1], [0, 0, 1, 1], [], []>} : vector<8x32xbf16>, vector<32x32xbf16>, vector<8x32xf32> -> vector<8x32xf32>
    %c0_27 = arith.constant 0 : index
    %c0_28 = arith.constant 0 : index
    %27 = vector.load %arg10[%c0_27, %c0_28] : memref<1x32xf32, #tpu.memory_space<vmem>>, vector<1x32xf32>
    %28 = vector.broadcast %27 : vector<1x32xf32> to vector<8x32xf32>
    %29 = arith.addf %26, %28 : vector<8x32xf32>
    %c0_29 = arith.constant 0 : index
    %c0_30 = arith.constant 0 : index
    %30 = vector.load %arg12[%c0_29, %c0_30] : memref<1x32xf32, #tpu.memory_space<vmem>>, vector<1x32xf32>
    %31 = vector.shape_cast %30 : vector<1x32xf32> to vector<1x32xf32>
    %32 = vector.broadcast %31 : vector<1x32xf32> to vector<8x32xf32>
    %33 = vector.extract_strided_slice %19 {offsets = [0, 0], sizes = [8, 8], strides = [1, 1]} : vector<8x32xf32> to vector<8x8xf32>
    %34 = arith.truncf %33 : vector<8x8xf32> to vector<8x8xbf16>
    %35 = vector.extract_strided_slice %24 {offsets = [0, 0], sizes = [8, 8], strides = [1, 1]} : vector<8x32xf32> to vector<8x8xf32>
    %36 = arith.truncf %35 : vector<8x8xf32> to vector<8x8xbf16>
    %37 = vector.extract_strided_slice %29 {offsets = [0, 0], sizes = [8, 8], strides = [1, 1]} : vector<8x32xf32> to vector<8x8xf32>
    %38 = arith.truncf %37 : vector<8x8xf32> to vector<8x8xbf16>
    %cst_31 = arith.constant dense<0.000000e+00> : vector<8x8xf32>
    %39 = tpu.matmul %34, %36, %cst_31 {dimension_numbers = #tpu.dot_dimension_numbers<[1], [1], [0], [0], [0, 0, 1, 0], [], []>} : vector<8x8xbf16>, vector<8x8xbf16>, vector<8x8xf32> -> vector<8x8xf32>
    %40 = arith.addf %39, %12 : vector<8x8xf32>
    %cst_32 = arith.constant dense<0xFF800000> : vector<8xf32>
    %41 = vector.multi_reduction <maximumf>, %40, %cst_32 [1] : vector<8x8xf32> to vector<8xf32>
    %42 = vector.shape_cast %41 : vector<8xf32> to vector<8x1xf32>
    %43 = vector.broadcast %42 : vector<8x1xf32> to vector<8x8xf32>
    %44 = arith.subf %40, %43 : vector<8x8xf32>
    %45 = math.exp %44 : vector<8x8xf32>
    %cst_33 = arith.constant dense<0.000000e+00> : vector<8xf32>
    %46 = vector.multi_reduction <add>, %45, %cst_33 [1] : vector<8x8xf32> to vector<8xf32>
    %47 = vector.shape_cast %46 : vector<8xf32> to vector<8x1xf32>
    %48 = tpu.reciprocal %47 {approx = true} : vector<8x1xf32> -> vector<8x1xf32>
    %49 = vector.broadcast %48 : vector<8x1xf32> to vector<8x8xf32>
    %50 = arith.mulf %45, %49 : vector<8x8xf32>
    %51 = arith.truncf %50 : vector<8x8xf32> to vector<8x8xbf16>
    %cst_34 = arith.constant dense<0.000000e+00> : vector<8x8xf32>
    %52 = tpu.matmul %51, %38, %cst_34 {dimension_numbers = #tpu.dot_dimension_numbers<[1], [0], [0], [1], [0, 0, 1, 1], [], []>} : vector<8x8xbf16>, vector<8x8xbf16>, vector<8x8xf32> -> vector<8x8xf32>
    %53 = arith.truncf %52 : vector<8x8xf32> to vector<8x8xbf16>
    %c0_35 = arith.constant 0 : index
    %c0_36 = arith.constant 0 : index
    %54 = vector.load %arg11[%c0_35, %c0_36] : memref<32x32xbf16, #tpu.memory_space<vmem>>, vector<8x32xbf16>
    %cst_37 = arith.constant dense<0.000000e+00> : vector<8x32xf32>
    %55 = tpu.matmul %53, %54, %cst_37 {dimension_numbers = #tpu.dot_dimension_numbers<[1], [0], [0], [1], [0, 0, 1, 1], [], []>} : vector<8x8xbf16>, vector<8x32xbf16>, vector<8x32xf32> -> vector<8x32xf32>
    %56 = arith.addf %32, %55 : vector<8x32xf32>
    %57 = vector.extract_strided_slice %19 {offsets = [0, 8], sizes = [8, 8], strides = [1, 1]} : vector<8x32xf32> to vector<8x8xf32>
    %58 = arith.truncf %57 : vector<8x8xf32> to vector<8x8xbf16>
    %59 = vector.extract_strided_slice %24 {offsets = [0, 8], sizes = [8, 8], strides = [1, 1]} : vector<8x32xf32> to vector<8x8xf32>
    %60 = arith.truncf %59 : vector<8x8xf32> to vector<8x8xbf16>
    %61 = vector.extract_strided_slice %29 {offsets = [0, 8], sizes = [8, 8], strides = [1, 1]} : vector<8x32xf32> to vector<8x8xf32>
    %62 = arith.truncf %61 : vector<8x8xf32> to vector<8x8xbf16>
    %cst_38 = arith.constant dense<0.000000e+00> : vector<8x8xf32>
    %63 = tpu.matmul %58, %60, %cst_38 {dimension_numbers = #tpu.dot_dimension_numbers<[1], [1], [0], [0], [0, 0, 1, 0], [], []>} : vector<8x8xbf16>, vector<8x8xbf16>, vector<8x8xf32> -> vector<8x8xf32>
    %64 = arith.addf %63, %12 : vector<8x8xf32>
    %cst_39 = arith.constant dense<0xFF800000> : vector<8xf32>
    %65 = vector.multi_reduction <maximumf>, %64, %cst_39 [1] : vector<8x8xf32> to vector<8xf32>
    %66 = vector.shape_cast %65 : vector<8xf32> to vector<8x1xf32>
    %67 = vector.broadcast %66 : vector<8x1xf32> to vector<8x8xf32>
    %68 = arith.subf %64, %67 : vector<8x8xf32>
    %69 = math.exp %68 : vector<8x8xf32>
    %cst_40 = arith.constant dense<0.000000e+00> : vector<8xf32>
    %70 = vector.multi_reduction <add>, %69, %cst_40 [1] : vector<8x8xf32> to vector<8xf32>
    %71 = vector.shape_cast %70 : vector<8xf32> to vector<8x1xf32>
    %72 = tpu.reciprocal %71 {approx = true} : vector<8x1xf32> -> vector<8x1xf32>
    %73 = vector.broadcast %72 : vector<8x1xf32> to vector<8x8xf32>
    %74 = arith.mulf %69, %73 : vector<8x8xf32>
    %75 = arith.truncf %74 : vector<8x8xf32> to vector<8x8xbf16>
    %cst_41 = arith.constant dense<0.000000e+00> : vector<8x8xf32>
    %76 = tpu.matmul %75, %62, %cst_41 {dimension_numbers = #tpu.dot_dimension_numbers<[1], [0], [0], [1], [0, 0, 1, 1], [], []>} : vector<8x8xbf16>, vector<8x8xbf16>, vector<8x8xf32> -> vector<8x8xf32>
    %77 = arith.truncf %76 : vector<8x8xf32> to vector<8x8xbf16>
    %c8 = arith.constant 8 : index
    %c0_42 = arith.constant 0 : index
    %78 = vector.load %arg11[%c8, %c0_42] : memref<32x32xbf16, #tpu.memory_space<vmem>>, vector<8x32xbf16>
    %cst_43 = arith.constant dense<0.000000e+00> : vector<8x32xf32>
    %79 = tpu.matmul %77, %78, %cst_43 {dimension_numbers = #tpu.dot_dimension_numbers<[1], [0], [0], [1], [0, 0, 1, 1], [], []>} : vector<8x8xbf16>, vector<8x32xbf16>, vector<8x32xf32> -> vector<8x32xf32>
    %80 = arith.addf %56, %79 : vector<8x32xf32>
    %81 = vector.extract_strided_slice %19 {offsets = [0, 16], sizes = [8, 8], strides = [1, 1]} : vector<8x32xf32> to vector<8x8xf32>
    %82 = arith.truncf %81 : vector<8x8xf32> to vector<8x8xbf16>
    %83 = vector.extract_strided_slice %24 {offsets = [0, 16], sizes = [8, 8], strides = [1, 1]} : vector<8x32xf32> to vector<8x8xf32>
    %84 = arith.truncf %83 : vector<8x8xf32> to vector<8x8xbf16>
    %85 = vector.extract_strided_slice %29 {offsets = [0, 16], sizes = [8, 8], strides = [1, 1]} : vector<8x32xf32> to vector<8x8xf32>
    %86 = arith.truncf %85 : vector<8x8xf32> to vector<8x8xbf16>
    %cst_44 = arith.constant dense<0.000000e+00> : vector<8x8xf32>
    %87 = tpu.matmul %82, %84, %cst_44 {dimension_numbers = #tpu.dot_dimension_numbers<[1], [1], [0], [0], [0, 0, 1, 0], [], []>} : vector<8x8xbf16>, vector<8x8xbf16>, vector<8x8xf32> -> vector<8x8xf32>
    %88 = arith.addf %87, %12 : vector<8x8xf32>
    %cst_45 = arith.constant dense<0xFF800000> : vector<8xf32>
    %89 = vector.multi_reduction <maximumf>, %88, %cst_45 [1] : vector<8x8xf32> to vector<8xf32>
    %90 = vector.shape_cast %89 : vector<8xf32> to vector<8x1xf32>
    %91 = vector.broadcast %90 : vector<8x1xf32> to vector<8x8xf32>
    %92 = arith.subf %88, %91 : vector<8x8xf32>
    %93 = math.exp %92 : vector<8x8xf32>
    %cst_46 = arith.constant dense<0.000000e+00> : vector<8xf32>
    %94 = vector.multi_reduction <add>, %93, %cst_46 [1] : vector<8x8xf32> to vector<8xf32>
    %95 = vector.shape_cast %94 : vector<8xf32> to vector<8x1xf32>
    %96 = tpu.reciprocal %95 {approx = true} : vector<8x1xf32> -> vector<8x1xf32>
    %97 = vector.broadcast %96 : vector<8x1xf32> to vector<8x8xf32>
    %98 = arith.mulf %93, %97 : vector<8x8xf32>
    %99 = arith.truncf %98 : vector<8x8xf32> to vector<8x8xbf16>
    %cst_47 = arith.constant dense<0.000000e+00> : vector<8x8xf32>
    %100 = tpu.matmul %99, %86, %cst_47 {dimension_numbers = #tpu.dot_dimension_numbers<[1], [0], [0], [1], [0, 0, 1, 1], [], []>} : vector<8x8xbf16>, vector<8x8xbf16>, vector<8x8xf32> -> vector<8x8xf32>
    %101 = arith.truncf %100 : vector<8x8xf32> to vector<8x8xbf16>
    %c16 = arith.constant 16 : index
    %c0_48 = arith.constant 0 : index
    %102 = vector.load %arg11[%c16, %c0_48] : memref<32x32xbf16, #tpu.memory_space<vmem>>, vector<8x32xbf16>
    %cst_49 = arith.constant dense<0.000000e+00> : vector<8x32xf32>
    %103 = tpu.matmul %101, %102, %cst_49 {dimension_numbers = #tpu.dot_dimension_numbers<[1], [0], [0], [1], [0, 0, 1, 1], [], []>} : vector<8x8xbf16>, vector<8x32xbf16>, vector<8x32xf32> -> vector<8x32xf32>
    %104 = arith.addf %80, %103 : vector<8x32xf32>
    %105 = vector.extract_strided_slice %19 {offsets = [0, 24], sizes = [8, 8], strides = [1, 1]} : vector<8x32xf32> to vector<8x8xf32>
    %106 = arith.truncf %105 : vector<8x8xf32> to vector<8x8xbf16>
    %107 = vector.extract_strided_slice %24 {offsets = [0, 24], sizes = [8, 8], strides = [1, 1]} : vector<8x32xf32> to vector<8x8xf32>
    %108 = arith.truncf %107 : vector<8x8xf32> to vector<8x8xbf16>
    %109 = vector.extract_strided_slice %29 {offsets = [0, 24], sizes = [8, 8], strides = [1, 1]} : vector<8x32xf32> to vector<8x8xf32>
    %110 = arith.truncf %109 : vector<8x8xf32> to vector<8x8xbf16>
    %cst_50 = arith.constant dense<0.000000e+00> : vector<8x8xf32>
    %111 = tpu.matmul %106, %108, %cst_50 {dimension_numbers = #tpu.dot_dimension_numbers<[1], [1], [0], [0], [0, 0, 1, 0], [], []>} : vector<8x8xbf16>, vector<8x8xbf16>, vector<8x8xf32> -> vector<8x8xf32>
    %112 = arith.addf %111, %12 : vector<8x8xf32>
    %cst_51 = arith.constant dense<0xFF800000> : vector<8xf32>
    %113 = vector.multi_reduction <maximumf>, %112, %cst_51 [1] : vector<8x8xf32> to vector<8xf32>
    %114 = vector.shape_cast %113 : vector<8xf32> to vector<8x1xf32>
    %115 = vector.broadcast %114 : vector<8x1xf32> to vector<8x8xf32>
    %116 = arith.subf %112, %115 : vector<8x8xf32>
    %117 = math.exp %116 : vector<8x8xf32>
    %cst_52 = arith.constant dense<0.000000e+00> : vector<8xf32>
    %118 = vector.multi_reduction <add>, %117, %cst_52 [1] : vector<8x8xf32> to vector<8xf32>
    %119 = vector.shape_cast %118 : vector<8xf32> to vector<8x1xf32>
    %120 = tpu.reciprocal %119 {approx = true} : vector<8x1xf32> -> vector<8x1xf32>
    %121 = vector.broadcast %120 : vector<8x1xf32> to vector<8x8xf32>
    %122 = arith.mulf %117, %121 : vector<8x8xf32>
    %123 = arith.truncf %122 : vector<8x8xf32> to vector<8x8xbf16>
    %cst_53 = arith.constant dense<0.000000e+00> : vector<8x8xf32>
    %124 = tpu.matmul %123, %110, %cst_53 {dimension_numbers = #tpu.dot_dimension_numbers<[1], [0], [0], [1], [0, 0, 1, 1], [], []>} : vector<8x8xbf16>, vector<8x8xbf16>, vector<8x8xf32> -> vector<8x8xf32>
    %125 = arith.truncf %124 : vector<8x8xf32> to vector<8x8xbf16>
    %c24 = arith.constant 24 : index
    %c0_54 = arith.constant 0 : index
    %126 = vector.load %arg11[%c24, %c0_54] : memref<32x32xbf16, #tpu.memory_space<vmem>>, vector<8x32xbf16>
    %cst_55 = arith.constant dense<0.000000e+00> : vector<8x32xf32>
    %127 = tpu.matmul %125, %126, %cst_55 {dimension_numbers = #tpu.dot_dimension_numbers<[1], [0], [0], [1], [0, 0, 1, 1], [], []>} : vector<8x8xbf16>, vector<8x32xbf16>, vector<8x32xf32> -> vector<8x32xf32>
    %128 = arith.addf %104, %127 : vector<8x32xf32>
    %c0_56 = arith.constant 0 : index
    %c0_57 = arith.constant 0 : index
    %c0_58 = arith.constant 0 : index
    %129 = vector.load %arg13[%c0_56, %c0_57, %c0_58] : memref<1x8x32xf32, #tpu.memory_space<vmem>>, vector<1x8x32xf32>
    %130 = vector.shape_cast %129 : vector<1x8x32xf32> to vector<8x32xf32>
    %131 = vector.shape_cast %128 : vector<8x32xf32> to vector<1x8x32xf32>
    tpu.vector_store %arg13[%c0_56, %c0_57, %c0_58], %131 {strides = array<i32>} : memref<1x8x32xf32, #tpu.memory_space<vmem>>, vector<1x8x32xf32>,
    return
  }
  func.func @transform_0(%arg0: i32) -> (i32, i32, i32) {
    %c0_i32 = arith.constant 0 : i32
    %c0_i32_0 = arith.constant 0 : i32
    %c0_i32_1 = arith.constant 0 : i32
    return %arg0, %c0_i32, %c0_i32_0 : i32, i32, i32
  }
  func.func @transform_1(%arg0: i32) -> (i32, i32, i32) {
    %c0_i32 = arith.constant 0 : i32
    %c0_i32_0 = arith.constant 0 : i32
    %c0_i32_1 = arith.constant 0 : i32
    return %arg0, %c0_i32, %c0_i32_0 : i32, i32, i32
  }
  func.func @transform_2(%arg0: i32) -> (i32, i32, i32) {
    %c0_i32 = arith.constant 0 : i32
    %c0_i32_0 = arith.constant 0 : i32
    %c0_i32_1 = arith.constant 0 : i32
    return %arg0, %c0_i32, %c0_i32_0 : i32, i32, i32
  }
  func.func @transform_3(%arg0: i32) -> (i32, i32, i32) {
    %c0_i32 = arith.constant 0 : i32
    %c0_i32_0 = arith.constant 0 : i32
    %c0_i32_1 = arith.constant 0 : i32
    return %arg0, %c0_i32, %c0_i32_0 : i32, i32, i32
  }
  func.func @transform_4(%arg0: i32) -> (i32, i32) {
    %c0_i32 = arith.constant 0 : i32
    %c0_i32_0 = arith.constant 0 : i32
    %c0_i32_1 = arith.constant 0 : i32
    return %c0_i32, %c0_i32_0 : i32, i32
  }
  func.func @transform_5(%arg0: i32) -> (i32, i32) {
    %c0_i32 = arith.constant 0 : i32
    %c0_i32_0 = arith.constant 0 : i32
    %c0_i32_1 = arith.constant 0 : i32
    return %c0_i32, %c0_i32_0 : i32, i32
  }
  func.func @transform_6(%arg0: i32) -> (i32, i32) {
    %c0_i32 = arith.constant 0 : i32
    %c0_i32_0 = arith.constant 0 : i32
    %c0_i32_1 = arith.constant 0 : i32
    return %c0_i32, %c0_i32_0 : i32, i32
  }
  func.func @transform_7(%arg0: i32) -> (i32, i32) {
    %c0_i32 = arith.constant 0 : i32
    %c0_i32_0 = arith.constant 0 : i32
    %c0_i32_1 = arith.constant 0 : i32
    return %c0_i32, %c0_i32_0 : i32, i32
  }
  func.func @transform_8(%arg0: i32) -> (i32, i32) {
    %c0_i32 = arith.constant 0 : i32
    %c0_i32_0 = arith.constant 0 : i32
    %c0_i32_1 = arith.constant 0 : i32
    return %c0_i32, %c0_i32_0 : i32, i32
  }
  func.func @transform_9(%arg0: i32) -> (i32, i32) {
    %c0_i32 = arith.constant 0 : i32
    %c0_i32_0 = arith.constant 0 : i32
    %c0_i32_1 = arith.constant 0 : i32
    return %c0_i32, %c0_i32_0 : i32, i32
  }
  func.func @transform_10(%arg0: i32) -> (i32, i32) {
    %c0_i32 = arith.constant 0 : i32
    %c0_i32_0 = arith.constant 0 : i32
    %c0_i32_1 = arith.constant 0 : i32
    return %c0_i32, %c0_i32_0 : i32, i32
  }
  func.func @transform_11(%arg0: i32) -> (i32, i32) {
    %c0_i32 = arith.constant 0 : i32
    %c0_i32_0 = arith.constant 0 : i32
    %c0_i32_1 = arith.constant 0 : i32
    return %c0_i32, %c0_i32_0 : i32, i32
  }
  func.func @transform_12(%arg0: i32) -> (i32, i32, i32) {
    %c0_i32 = arith.constant 0 : i32
    %c0_i32_0 = arith.constant 0 : i32
    %c0_i32_1 = arith.constant 0 : i32
    return %arg0, %c0_i32, %c0_i32_0 : i32, i32, i32
  }
}

</mosaic_0001>

<llo_original>
// kernel: tpu_custom_call.1
$region0: #{tpu_custom_call.1}
  #allocation0 [shape = 'u32[]', space=smem, size = 0x4, offset = 0x4, fixed_abs, tag = 'smem constant byte address 0x4 - core index']
  #allocation1 [shape = 'u32[144,128]{1,0:T(1,128)}', space=vmem, size = 0x12000, scoped, tag = 'internal scratch']
  %s0 = inlined_call_operand.hbm [shape: bf16[2,8,32], index: 0, kind: input, shape index: {}]
  %s1 = inlined_call_operand.hbm [shape: bf16[2,8,32], index: 1, kind: input, shape index: {}]
  %s2 = inlined_call_operand.hbm [shape: bf16[2,8,32], index: 2, kind: input, shape index: {}]
  %s3 = inlined_call_operand.hbm [shape: f32[2,8,8], index: 3, kind: input, shape index: {}]
  %s4 = inlined_call_operand.hbm [shape: bf16[32,32], index: 4, kind: input, shape index: {}]
  %s5 = inlined_call_operand.vmem [shape: f32[1,32], index: 5, kind: input, shape index: {}]
  %s6 = inlined_call_operand.hbm [shape: bf16[32,32], index: 6, kind: input, shape index: {}]
  %s7 = inlined_call_operand.vmem [shape: f32[1,32], index: 7, kind: input, shape index: {}]
  %s8 = inlined_call_operand.hbm [shape: bf16[32,32], index: 8, kind: input, shape index: {}]
  %s9 = inlined_call_operand.hbm [shape: f32[1,32], index: 9, kind: input, shape index: {}]
  %s10 = inlined_call_operand.vmem [shape: bf16[32,32], index: 10, kind: input, shape index: {}]
  %s11 = inlined_call_operand.vmem [shape: f32[1,32], index: 11, kind: input, shape index: {}]
  %s12 = inlined_call_operand.hbm [shape: f32[2,8,32], index: 12, kind: output, shape index: {}]
  %s13 = sld [smem:[#allocation0]]
  $region113: #{tpu_custom_call.1} parent=0
    _
  %s15 = ssub.s32 1, %s13
  %s16 = scalar_select 0, %s15, %s13
  $region1: #{tpu_custom_call.1} parent=0
    #allocation2 [shape = 'u8[4096]{0}', space=vmem, size = 0x1000, scoped, tag = 'input window, operand 0']
    #allocation3 [shape = 's32[2]{0}', space=sflag, size = 0x8, scoped, tag = 'scoped memory for tpu_custom_call.1']
    #allocation4 [shape = 's32[2]{0}', space=sflag, size = 0x8, scoped, tag = 'scoped memory for tpu_custom_call.1']
    #allocation5 [shape = 'u8[4096]{0}', space=vmem, size = 0x1000, scoped, tag = 'input window, operand 1']
    #allocation6 [shape = 's32[2]{0}', space=sflag, size = 0x8, scoped, tag = 'scoped memory for tpu_custom_call.1']
    #allocation7 [shape = 'u8[4096]{0}', space=vmem, size = 0x1000, scoped, tag = 'input window, operand 2']
    #allocation8 [shape = 'u8[8192]{0}', space=vmem, size = 0x2000, scoped, tag = 'input window, operand 3']
    #allocation9 [shape = 's32[2]{0}', space=sflag, size = 0x8, scoped, tag = 'scoped memory for tpu_custom_call.1']
    #allocation10 [shape = 'u8[8192]{0}', space=vmem, size = 0x2000, scoped, tag = 'input window, operand 4, single buffered']
    #allocation11 [shape = 'u8[8192]{0}', space=vmem, size = 0x2000, scoped, tag = 'input window, operand 6, single buffered']
    #allocation12 [shape = 's32[1]{0}', space=sflag, size = 0x4, scoped, tag = 'scoped memory for tpu_custom_call.1']
    #allocation13 [shape = 'u8[8192]{0}', space=vmem, size = 0x2000, scoped, tag = 'input window, operand 8, single buffered']
    #allocation14 [shape = 'u8[512]{0}', space=vmem, size = 0x400, scoped, tag = 'input window, operand 9, single buffered']
    #allocation15 [shape = 's32[1]{0}', space=sflag, size = 0x4, scoped, tag = 'scoped memory for tpu_custom_call.1']
    #allocation16 [shape = 'u8[8192]{0}', space=vmem, size = 0x2000, scoped, tag = 'output window, operand 0']
    %17 = vsyncpa [#allocation3], 0
    %s18 = scalar_lea.sflag [#allocation3], 1
    %19 = vsyncpa %s18, 0
    %20 = vsyncpa [#allocation6], 0
    %s21 = scalar_lea.sflag [#allocation6], 1
    %22 = vsyncpa %s21, 0
    %23 = vsyncpa [#allocation9], 0
    %s24 = scalar_lea.sflag [#allocation9], 1
    %25 = vsyncpa %s24, 0
    %26 = vsyncpa [#allocation12], 0
    %27 = vsyncpa [#allocation15], 0
    %28 = vsyncpa [#allocation4], 0
    %s29 = scalar_lea.sflag [#allocation4], 1
    %30 = vsyncpa %s29, 0
    loop: start=0, step=1, limit=4
    $region2: #{tpu_custom_call.1} parent=1 // loop_pre_header
      _
    $region3: #{tpu_custom_call.1} parent=1 // loop_header
      %s32 = sphi 0, %s36
      %p33 = scmp.ge.s32.totalorder %s32, 4
      %s42 = sphi 0, %s44
      %s45 = sphi 0, %s42
      %s46 = sphi 0, %s45
      %s62 = sphi 0, %s46
      %s68 = sphi 0, %s70
      %s71 = sphi 0, %s68
      %s72 = sphi 0, %s71
      %s88 = sphi 0, %s72
      %s94 = sphi 0, %s96
      %s97 = sphi 0, %s94
      %s98 = sphi 0, %s97
      %s114 = sphi 0, %s98
      %s120 = sphi 0, %s122
      %s123 = sphi 0, %s120
      %s124 = sphi 0, %s123
      %s140 = sphi 0, %s124
      %s144 = sphi 0, %s144
      %s146 = sphi 0, %s144
      %s147 = sphi 0, %s146
      %s161 = sphi 0, %s147
      %s165 = sphi 0, %s165
      %s167 = sphi 0, %s165
      %s168 = sphi 0, %s167
      %s182 = sphi 0, %s168
      %s186 = sphi 0, %s186
      %s188 = sphi 0, %s186
      %s189 = sphi 0, %s188
      %s203 = sphi 0, %s189
      %s207 = sphi 0, %s207
      %s209 = sphi 0, %s207
      %s210 = sphi 0, %s209
      %s224 = sphi 0, %s210
      %s228 = sphi 0, %s228
      %s230 = sphi 0, %s228
      %s231 = sphi 0, %s230
      %s245 = sphi 0, %s231
      %s249 = sphi 0, %s249
      %s251 = sphi 0, %s249
      %s252 = sphi 0, %s251
      %s266 = sphi 0, %s252
      %s270 = sphi 0, %s270
      %s272 = sphi 0, %s270
      %s273 = sphi 0, %s272
      %s287 = sphi 0, %s273
      %s291 = sphi 0, %s291
      %s293 = sphi 0, %s291
      %s294 = sphi 0, %s293
      %s308 = sphi 0, %s294
      %s314 = sphi 0, %s316
      %s317 = sphi 0, %s314
      %s318 = sphi 0, %s317
      %s334 = sphi 0, %s318
    $region4: #{tpu_custom_call.1} parent=1 // loop_header_branch
      %35 = sbr.rel (%p33) target = $region8
    $region5: #{tpu_custom_call.1} parent=1 // loop_body
      %s37 = ssub.s32 %s32, 1
      %s38 = ssub.s32 %s32, 2
      %s39 = sadd.s32 %s32, 1
      %s40 = ssub.s32 %s32, %s39
      %p41 = scmp.eq.s32.totalorder %s40, 0
      %s43 = sadd.s32 %s42, 1
      %s44 = scalar_select %p41, %s42, %s43
      %p47 = pneg %p41
      %p48 = scmp.eq.s32.totalorder %s32, 1
      %p49 = por %p47, %p48
      %p50 = scmp.ne.s32.totalorder %s42, %s45
      %p51 = scmp.eq.s32.totalorder %s32, 0
      %p52 = por %p50, %p51
      %p53 = scmp.ne.s32.totalorder %s42, %s45
      %p54 = scmp.eq.s32.totalorder %s37, 1
      %p55 = por %p53, %p54
      %p56 = scmp.ne.s32.totalorder %s45, %s46
      %p57 = scmp.eq.s32.totalorder %s37, 0
      %p58 = por %p56, %p57
      %p59 = scmp.ne.s32.totalorder %s45, %s46
      %p60 = scmp.eq.s32.totalorder %s38, 1
      %p61 = por %p59, %p60
      %p63 = scmp.ne.s32.totalorder %s46, %s62
      %p64 = scmp.eq.s32.totalorder %s38, 0
      %p65 = por %p63, %p64
      %s66 = ssub.s32 %s32, %s39
      %p67 = scmp.eq.s32.totalorder %s66, 0
      %s69 = sadd.s32 %s68, 1
      %s70 = scalar_select %p67, %s68, %s69
      %p73 = pneg %p67
      %p74 = scmp.eq.s32.totalorder %s32, 1
      %p75 = por %p73, %p74
      %p76 = scmp.ne.s32.totalorder %s68, %s71
      %p77 = scmp.eq.s32.totalorder %s32, 0
      %p78 = por %p76, %p77
      %p79 = scmp.ne.s32.totalorder %s68, %s71
      %p80 = scmp.eq.s32.totalorder %s37, 1
      %p81 = por %p79, %p80
      %p82 = scmp.ne.s32.totalorder %s71, %s72
      %p83 = scmp.eq.s32.totalorder %s37, 0
      %p84 = por %p82, %p83
      %p85 = scmp.ne.s32.totalorder %s71, %s72
      %p86 = scmp.eq.s32.totalorder %s38, 1
      %p87 = por %p85, %p86
      %p89 = scmp.ne.s32.totalorder %s72, %s88
      %p90 = scmp.eq.s32.totalorder %s38, 0
      %p91 = por %p89, %p90
      %s92 = ssub.s32 %s32, %s39
      %p93 = scmp.eq.s32.totalorder %s92, 0
      %s95 = sadd.s32 %s94, 1
      %s96 = scalar_select %p93, %s94, %s95
      %p99 = pneg %p93
      %p100 = scmp.eq.s32.totalorder %s32, 1
      %p101 = por %p99, %p100
      %p102 = scmp.ne.s32.totalorder %s94, %s97
      %p103 = scmp.eq.s32.totalorder %s32, 0
      %p104 = por %p102, %p103
      %p105 = scmp.ne.s32.totalorder %s94, %s97
      %p106 = scmp.eq.s32.totalorder %s37, 1
      %p107 = por %p105, %p106
      %p108 = scmp.ne.s32.totalorder %s97, %s98
      %p109 = scmp.eq.s32.totalorder %s37, 0
      %p110 = por %p108, %p109
      %p111 = scmp.ne.s32.totalorder %s97, %s98
      %p112 = scmp.eq.s32.totalorder %s38, 1
      %p113 = por %p111, %p112
      %p115 = scmp.ne.s32.totalorder %s98, %s114
      %p116 = scmp.eq.s32.totalorder %s38, 0
      %p117 = por %p115, %p116
      %s118 = ssub.s32 %s32, %s39
      %p119 = scmp.eq.s32.totalorder %s118, 0
      %s121 = sadd.s32 %s120, 1
      %s122 = scalar_select %p119, %s120, %s121
      %p125 = pneg %p119
      %p126 = scmp.eq.s32.totalorder %s32, 1
      %p127 = por %p125, %p126
      %p128 = scmp.ne.s32.totalorder %s120, %s123
      %p129 = scmp.eq.s32.totalorder %s32, 0
      %p130 = por %p128, %p129
      %p131 = scmp.ne.s32.totalorder %s120, %s123
      %p132 = scmp.eq.s32.totalorder %s37, 1
      %p133 = por %p131, %p132
      %p134 = scmp.ne.s32.totalorder %s123, %s124
      %p135 = scmp.eq.s32.totalorder %s37, 0
      %p136 = por %p134, %p135
      %p137 = scmp.ne.s32.totalorder %s123, %s124
      %p138 = scmp.eq.s32.totalorder %s38, 1
      %p139 = por %p137, %p138
      %p141 = scmp.ne.s32.totalorder %s124, %s140
      %p142 = scmp.eq.s32.totalorder %s38, 0
      %p143 = por %p141, %p142
      %s145 = sadd.s32 %s144, 1
      %p148 = scmp.eq.s32.totalorder %s32, 1
      %p149 = scmp.ne.s32.totalorder %s144, %s146
      %p150 = scmp.eq.s32.totalorder %s32, 0
      %p151 = por %p149, %p150
      %p152 = scmp.ne.s32.totalorder %s144, %s146
      %p153 = scmp.eq.s32.totalorder %s37, 1
      %p154 = por %p152, %p153
      %p155 = scmp.ne.s32.totalorder %s146, %s147
      %p156 = scmp.eq.s32.totalorder %s37, 0
      %p157 = por %p155, %p156
      %p158 = scmp.ne.s32.totalorder %s146, %s147
      %p159 = scmp.eq.s32.totalorder %s38, 1
      %p160 = por %p158, %p159
      %p162 = scmp.ne.s32.totalorder %s147, %s161
      %p163 = scmp.eq.s32.totalorder %s38, 0
      %p164 = por %p162, %p163
      %s166 = sadd.s32 %s165, 1
      %p169 = scmp.eq.s32.totalorder %s32, 1
      %p170 = scmp.ne.s32.totalorder %s165, %s167
      %p171 = scmp.eq.s32.totalorder %s32, 0
      %p172 = por %p170, %p171
      %p173 = scmp.ne.s32.totalorder %s165, %s167
      %p174 = scmp.eq.s32.totalorder %s37, 1
      %p175 = por %p173, %p174
      %p176 = scmp.ne.s32.totalorder %s167, %s168
      %p177 = scmp.eq.s32.totalorder %s37, 0
      %p178 = por %p176, %p177
      %p179 = scmp.ne.s32.totalorder %s167, %s168
      %p180 = scmp.eq.s32.totalorder %s38, 1
      %p181 = por %p179, %p180
      %p183 = scmp.ne.s32.totalorder %s168, %s182
      %p184 = scmp.eq.s32.totalorder %s38, 0
      %p185 = por %p183, %p184
      %s187 = sadd.s32 %s186, 1
      %p190 = scmp.eq.s32.totalorder %s32, 1
      %p191 = scmp.ne.s32.totalorder %s186, %s188
      %p192 = scmp.eq.s32.totalorder %s32, 0
      %p193 = por %p191, %p192
      %p194 = scmp.ne.s32.totalorder %s186, %s188
      %p195 = scmp.eq.s32.totalorder %s37, 1
      %p196 = por %p194, %p195
      %p197 = scmp.ne.s32.totalorder %s188, %s189
      %p198 = scmp.eq.s32.totalorder %s37, 0
      %p199 = por %p197, %p198
      %p200 = scmp.ne.s32.totalorder %s188, %s189
      %p201 = scmp.eq.s32.totalorder %s38, 1
      %p202 = por %p200, %p201
      %p204 = scmp.ne.s32.totalorder %s189, %s203
      %p205 = scmp.eq.s32.totalorder %s38, 0
      %p206 = por %p204, %p205
      %s208 = sadd.s32 %s207, 1
      %p211 = scmp.eq.s32.totalorder %s32, 1
      %p212 = scmp.ne.s32.totalorder %s207, %s209
      %p213 = scmp.eq.s32.totalorder %s32, 0
      %p214 = por %p212, %p213
      %p215 = scmp.ne.s32.totalorder %s207, %s209
      %p216 = scmp.eq.s32.totalorder %s37, 1
      %p217 = por %p215, %p216
      %p218 = scmp.ne.s32.totalorder %s209, %s210
      %p219 = scmp.eq.s32.totalorder %s37, 0
      %p220 = por %p218, %p219
      %p221 = scmp.ne.s32.totalorder %s209, %s210
      %p222 = scmp.eq.s32.totalorder %s38, 1
      %p223 = por %p221, %p222
      %p225 = scmp.ne.s32.totalorder %s210, %s224
      %p226 = scmp.eq.s32.totalorder %s38, 0
      %p227 = por %p225, %p226
      %s229 = sadd.s32 %s228, 1
      %p232 = scmp.eq.s32.totalorder %s32, 1
      %p233 = scmp.ne.s32.totalorder %s228, %s230
      %p234 = scmp.eq.s32.totalorder %s32, 0
      %p235 = por %p233, %p234
      %p236 = scmp.ne.s32.totalorder %s228, %s230
      %p237 = scmp.eq.s32.totalorder %s37, 1
      %p238 = por %p236, %p237
      %p239 = scmp.ne.s32.totalorder %s230, %s231
      %p240 = scmp.eq.s32.totalorder %s37, 0
      %p241 = por %p239, %p240
      %p242 = scmp.ne.s32.totalorder %s230, %s231
      %p243 = scmp.eq.s32.totalorder %s38, 1
      %p244 = por %p242, %p243
      %p246 = scmp.ne.s32.totalorder %s231, %s245
      %p247 = scmp.eq.s32.totalorder %s38, 0
      %p248 = por %p246, %p247
      %s250 = sadd.s32 %s249, 1
      %p253 = scmp.eq.s32.totalorder %s32, 1
      %p254 = scmp.ne.s32.totalorder %s249, %s251
      %p255 = scmp.eq.s32.totalorder %s32, 0
      %p256 = por %p254, %p255
      %p257 = scmp.ne.s32.totalorder %s249, %s251
      %p258 = scmp.eq.s32.totalorder %s37, 1
      %p259 = por %p257, %p258
      %p260 = scmp.ne.s32.totalorder %s251, %s252
      %p261 = scmp.eq.s32.totalorder %s37, 0
      %p262 = por %p260, %p261
      %p263 = scmp.ne.s32.totalorder %s251, %s252
      %p264 = scmp.eq.s32.totalorder %s38, 1
      %p265 = por %p263, %p264
      %p267 = scmp.ne.s32.totalorder %s252, %s266
      %p268 = scmp.eq.s32.totalorder %s38, 0
      %p269 = por %p267, %p268
      %s271 = sadd.s32 %s270, 1
      %p274 = scmp.eq.s32.totalorder %s32, 1
      %p275 = scmp.ne.s32.totalorder %s270, %s272
      %p276 = scmp.eq.s32.totalorder %s32, 0
      %p277 = por %p275, %p276
      %p278 = scmp.ne.s32.totalorder %s270, %s272
      %p279 = scmp.eq.s32.totalorder %s37, 1
      %p280 = por %p278, %p279
      %p281 = scmp.ne.s32.totalorder %s272, %s273
      %p282 = scmp.eq.s32.totalorder %s37, 0
      %p283 = por %p281, %p282
      %p284 = scmp.ne.s32.totalorder %s272, %s273
      %p285 = scmp.eq.s32.totalorder %s38, 1
      %p286 = por %p284, %p285
      %p288 = scmp.ne.s32.totalorder %s273, %s287
      %p289 = scmp.eq.s32.totalorder %s38, 0
      %p290 = por %p288, %p289
      %s292 = sadd.s32 %s291, 1
      %p295 = scmp.eq.s32.totalorder %s32, 1
      %p296 = scmp.ne.s32.totalorder %s291, %s293
      %p297 = scmp.eq.s32.totalorder %s32, 0
      %p298 = por %p296, %p297
      %p299 = scmp.ne.s32.totalorder %s291, %s293
      %p300 = scmp.eq.s32.totalorder %s37, 1
      %p301 = por %p299, %p300
      %p302 = scmp.ne.s32.totalorder %s293, %s294
      %p303 = scmp.eq.s32.totalorder %s37, 0
      %p304 = por %p302, %p303
      %p305 = scmp.ne.s32.totalorder %s293, %s294
      %p306 = scmp.eq.s32.totalorder %s38, 1
      %p307 = por %p305, %p306
      %p309 = scmp.ne.s32.totalorder %s294, %s308
      %p310 = scmp.eq.s32.totalorder %s38, 0
      %p311 = por %p309, %p310
      %s312 = ssub.s32 %s32, %s39
      %p313 = scmp.eq.s32.totalorder %s312, 0
      %s315 = sadd.s32 %s314, 1
      %s316 = scalar_select %p313, %s314, %s315
      %p319 = pneg %p313
      %p320 = scmp.eq.s32.totalorder %s32, 1
      %p321 = por %p319, %p320
      %p322 = scmp.ne.s32.totalorder %s314, %s317
      %p323 = scmp.eq.s32.totalorder %s32, 0
      %p324 = por %p322, %p323
      %p325 = scmp.ne.s32.totalorder %s314, %s317
      %p326 = scmp.eq.s32.totalorder %s37, 1
      %p327 = por %p325, %p326
      %p328 = scmp.ne.s32.totalorder %s317, %s318
      %p329 = scmp.eq.s32.totalorder %s37, 0
      %p330 = por %p328, %p329
      %p331 = scmp.ne.s32.totalorder %s317, %s318
      %p332 = scmp.eq.s32.totalorder %s38, 1
      %p333 = por %p331, %p332
      %p335 = scmp.ne.s32.totalorder %s318, %s334
      %p336 = scmp.eq.s32.totalorder %s38, 0
      %p337 = por %p335, %p336
      %p338 = scmp.le.s32.totalorder 1, %s32
      %p339 = scmp.lt.s32.totalorder %s32, 3
      %p340 = pnand %p338, %p339
      %p341 = pneg %p340
      // Predicated region
      $region9: #{tpu_custom_call.1} parent=5 // pred_check
        _
      $region10: #{tpu_custom_call.1} parent=5 // pred_check_branch
        %343 = sbr.rel (%p340) target = $region12
      $region11: #{tpu_custom_call.1} parent=5 // pred_region
        %s344 = ssub.s32 %s32, 1
        // Predicated region
        $region13: #{tpu_custom_call.1} parent=11 // pred_check
          %p345 = pneg %p157
        $region14: #{tpu_custom_call.1} parent=11 // pred_check_branch
          %347 = sbr.rel (%p345) target = $region16
        $region15: #{tpu_custom_call.1} parent=11 // pred_region
          %s349 = ssub.s32 256, 256
          %350 = vsyncadd [#allocation9], %s349
          %s351 = sshll.u32 [#allocation10], 4
          %s352 = int_to_ptr.vmem [resolvable:$true] %s351
          %357 = dma.hbm_to_vmem [thread:$0]  %s4, 256, %s352, [#allocation9], 64, 64, 4
        $region16: #{tpu_custom_call.1} parent=11 // pred_fallthru
          _
        // Predicated region
        $region17: #{tpu_custom_call.1} parent=11 // pred_check
          %p358 = pneg %p178
        $region18: #{tpu_custom_call.1} parent=11 // pred_check_branch
          %360 = sbr.rel (%p358) target = $region20
        $region19: #{tpu_custom_call.1} parent=11 // pred_region
          _
        $region20: #{tpu_custom_call.1} parent=11 // pred_fallthru
          _
        // Predicated region
        $region21: #{tpu_custom_call.1} parent=11 // pred_check
          %p361 = pneg %p199
        $region22: #{tpu_custom_call.1} parent=11 // pred_check_branch
          %363 = sbr.rel (%p361) target = $region24
        $region23: #{tpu_custom_call.1} parent=11 // pred_region
          %s365 = ssub.s32 256, 256
          %366 = vsyncadd [#allocation12], %s365
          %s367 = sshll.u32 [#allocation11], 4
          %s368 = int_to_ptr.vmem [resolvable:$true] %s367
          %373 = dma.hbm_to_vmem [thread:$0]  %s6, 256, %s368, [#allocation12], 64, 64, 4
        $region24: #{tpu_custom_call.1} parent=11 // pred_fallthru
          _
        // Predicated region
        $region25: #{tpu_custom_call.1} parent=11 // pred_check
          %p374 = pneg %p220
        $region26: #{tpu_custom_call.1} parent=11 // pred_check_branch
          %376 = sbr.rel (%p374) target = $region28
        $region27: #{tpu_custom_call.1} parent=11 // pred_region
          _
        $region28: #{tpu_custom_call.1} parent=11 // pred_fallthru
          _
        // Predicated region
        $region29: #{tpu_custom_call.1} parent=11 // pred_check
          %p377 = pneg %p241
        $region30: #{tpu_custom_call.1} parent=11 // pred_check_branch
          %379 = sbr.rel (%p377) target = $region32
        $region31: #{tpu_custom_call.1} parent=11 // pred_region
          %s381 = ssub.s32 256, 256
          %382 = vsyncadd [#allocation12], %s381
          %s383 = sshll.u32 [#allocation13], 4
          %s384 = int_to_ptr.vmem [resolvable:$true] %s383
          %389 = dma.hbm_to_vmem [thread:$0]  %s8, 256, %s384, [#allocation12], 64, 64, 4
        $region32: #{tpu_custom_call.1} parent=11 // pred_fallthru
          _
        // Predicated region
        $region33: #{tpu_custom_call.1} parent=11 // pred_check
          %p390 = pneg %p262
        $region34: #{tpu_custom_call.1} parent=11 // pred_check_branch
          %392 = sbr.rel (%p390) target = $region36
        $region35: #{tpu_custom_call.1} parent=11 // pred_region
          %s394 = ssub.s32 16, 16
          %395 = vsyncadd [#allocation15], %s394
          %s397 = sshll.u32 [#allocation14], 4
          %s398 = int_to_ptr.vmem [resolvable:$true] %s397
          %400 = dma.hbm_to_vmem [thread:$0]  %s9, 16, %s398, [#allocation15]
        $region36: #{tpu_custom_call.1} parent=11 // pred_fallthru
          _
        // Predicated region
        $region37: #{tpu_custom_call.1} parent=11 // pred_check
          %p401 = pneg %p283
        $region38: #{tpu_custom_call.1} parent=11 // pred_check_branch
          %403 = sbr.rel (%p401) target = $region40
        $region39: #{tpu_custom_call.1} parent=11 // pred_region
          _
        $region40: #{tpu_custom_call.1} parent=11 // pred_fallthru
          _
        // Predicated region
        $region41: #{tpu_custom_call.1} parent=11 // pred_check
          %p404 = pneg %p304
        $region42: #{tpu_custom_call.1} parent=11 // pred_check_branch
          %406 = sbr.rel (%p404) target = $region44
        $region43: #{tpu_custom_call.1} parent=11 // pred_region
          _
        $region44: #{tpu_custom_call.1} parent=11 // pred_fallthru
          _
      $region12: #{tpu_custom_call.1} parent=5 // pred_fallthru
        _
      %p407 = scmp.lt.s32.totalorder %s32, 2
      // Predicated region
      $region45: #{tpu_custom_call.1} parent=5 // pred_check
        %p408 = pneg %p407
      $region46: #{tpu_custom_call.1} parent=5 // pred_check_branch
        %410 = sbr.rel (%p408) target = $region48
      $region47: #{tpu_custom_call.1} parent=5 // pred_region
        // Predicated region
        $region49: #{tpu_custom_call.1} parent=47 // pred_check
          %p411 = pneg %p52
        $region50: #{tpu_custom_call.1} parent=47 // pred_check_branch
          %413 = sbr.rel (%p411) target = $region52
        $region51: #{tpu_custom_call.1} parent=47 // pred_region
          %s414 = sand.u32 %s42, 1
          %s415 = scalar_lea.sflag [#allocation3], %s414
          %s416 = sand.u32 %s42, 1
          %s417 = smul.addr %s416, 4
          %s418 = scalar_lea.vmem [#allocation2], %s417
          %s420 = ssub.s32 64, 64
          %421 = vsyncadd %s415, %s420
          %s422 = smul.addr %s32, 64
          %s423 = scalar_lea.hbm %s0, %s422
          %s425 = sshll.u32 %s418, 4
          %s426 = int_to_ptr.vmem [resolvable:$true] %s425
          %428 = dma.hbm_to_vmem [thread:$0]  %s423, 64, %s426, %s415
        $region52: #{tpu_custom_call.1} parent=47 // pred_fallthru
          _
        // Predicated region
        $region53: #{tpu_custom_call.1} parent=47 // pred_check
          %p429 = pneg %p78
        $region54: #{tpu_custom_call.1} parent=47 // pred_check_branch
          %431 = sbr.rel (%p429) target = $region56
        $region55: #{tpu_custom_call.1} parent=47 // pred_region
          %s432 = sand.u32 %s32, 1
          %s433 = scalar_lea.sflag [#allocation6], %s432
          %s434 = sand.u32 %s68, 1
          %s435 = smul.addr %s434, 4
          %s436 = scalar_lea.vmem [#allocation5], %s435
          %s438 = ssub.s32 64, 64
          %439 = vsyncadd %s433, %s438
          %s440 = smul.addr %s32, 64
          %s441 = scalar_lea.hbm %s1, %s440
          %s443 = sshll.u32 %s436, 4
          %s444 = int_to_ptr.vmem [resolvable:$true] %s443
          %446 = dma.hbm_to_vmem [thread:$0]  %s441, 64, %s444, %s433
        $region56: #{tpu_custom_call.1} parent=47 // pred_fallthru
          _
        // Predicated region
        $region57: #{tpu_custom_call.1} parent=47 // pred_check
          %p447 = pneg %p104
        $region58: #{tpu_custom_call.1} parent=47 // pred_check_branch
          %449 = sbr.rel (%p447) target = $region60
        $region59: #{tpu_custom_call.1} parent=47 // pred_region
          %s450 = sand.u32 %s32, 1
          %s451 = scalar_lea.sflag [#allocation6], %s450
          %s452 = sand.u32 %s94, 1
          %s453 = smul.addr %s452, 4
          %s454 = scalar_lea.vmem [#allocation7], %s453
          %s456 = ssub.s32 64, 64
          %457 = vsyncadd %s451, %s456
          %s458 = smul.addr %s32, 64
          %s459 = scalar_lea.hbm %s2, %s458
          %s461 = sshll.u32 %s454, 4
          %s462 = int_to_ptr.vmem [resolvable:$true] %s461
          %464 = dma.hbm_to_vmem [thread:$0]  %s459, 64, %s462, %s451
        $region60: #{tpu_custom_call.1} parent=47 // pred_fallthru
          _
        // Predicated region
        $region61: #{tpu_custom_call.1} parent=47 // pred_check
          %p465 = pneg %p130
        $region62: #{tpu_custom_call.1} parent=47 // pred_check_branch
          %467 = sbr.rel (%p465) target = $region64
        $region63: #{tpu_custom_call.1} parent=47 // pred_region
          %s468 = sand.u32 %s32, 1
          %s469 = scalar_lea.sflag [#allocation9], %s468
          %s470 = sand.u32 %s120, 1
          %s471 = smul.addr %s470, 8
          %s472 = scalar_lea.vmem [#allocation8], %s471
          %s474 = ssub.s32 128, 128
          %475 = vsyncadd %s469, %s474
          %s476 = smul.addr %s32, 128
          %s477 = scalar_lea.hbm %s3, %s476
          %s479 = sshll.u32 %s472, 4
          %s480 = int_to_ptr.vmem [resolvable:$true] %s479
          %482 = dma.hbm_to_vmem [thread:$0]  %s477, 128, %s480, %s469
        $region64: #{tpu_custom_call.1} parent=47 // pred_fallthru
          _
      $region48: #{tpu_custom_call.1} parent=5 // pred_fallthru
        _
      %p483 = scmp.le.s32.totalorder 1, %s32
      %p484 = scmp.lt.s32.totalorder %s32, 3
      %p485 = pnand %p483, %p484
      %p486 = pneg %p485
      // Predicated region
      $region65: #{tpu_custom_call.1} parent=5 // pred_check
        _
      $region66: #{tpu_custom_call.1} parent=5 // pred_check_branch
        %488 = sbr.rel (%p485) target = $region68
      $region67: #{tpu_custom_call.1} parent=5 // pred_region
        %s489 = ssub.s32 %s32, 1
        %s490 = sand.u32 %s45, 1
        %s491 = scalar_lea.sflag [#allocation3], %s490
        %s492 = sand.u32 %s45, 1
        %s493 = smul.addr %s492, 4
        %s494 = scalar_lea.vmem [#allocation2], %s493
        // Predicated region
        $region69: #{tpu_custom_call.1} parent=67 // pred_check
          %p495 = pneg %p58
        $region70: #{tpu_custom_call.1} parent=67 // pred_check_branch
          %497 = sbr.rel (%p495) target = $region72
        $region71: #{tpu_custom_call.1} parent=67 // pred_region
          %498 = dma.done %s491, 64
        $region72: #{tpu_custom_call.1} parent=67 // pred_fallthru
          _
        %s499 = sand.u32 %s37, 1
        %s500 = scalar_lea.sflag [#allocation6], %s499
        %s501 = sand.u32 %s71, 1
        %s502 = smul.addr %s501, 4
        %s503 = scalar_lea.vmem [#allocation5], %s502
        // Predicated region
        $region73: #{tpu_custom_call.1} parent=67 // pred_check
          %p504 = pneg %p84
        $region74: #{tpu_custom_call.1} parent=67 // pred_check_branch
          %506 = sbr.rel (%p504) target = $region76
        $region75: #{tpu_custom_call.1} parent=67 // pred_region
          %507 = dma.done %s500, 64
        $region76: #{tpu_custom_call.1} parent=67 // pred_fallthru
          _
        %s508 = sand.u32 %s37, 1
        %s509 = scalar_lea.sflag [#allocation6], %s508
        %s510 = sand.u32 %s97, 1
        %s511 = smul.addr %s510, 4
        %s512 = scalar_lea.vmem [#allocation7], %s511
        // Predicated region
        $region77: #{tpu_custom_call.1} parent=67 // pred_check
          %p513 = pneg %p110
        $region78: #{tpu_custom_call.1} parent=67 // pred_check_branch
          %515 = sbr.rel (%p513) target = $region80
        $region79: #{tpu_custom_call.1} parent=67 // pred_region
          %516 = dma.done %s509, 64
        $region80: #{tpu_custom_call.1} parent=67 // pred_fallthru
          _
        %s517 = sand.u32 %s37, 1
        %s518 = scalar_lea.sflag [#allocation9], %s517
        %s519 = sand.u32 %s123, 1
        %s520 = smul.addr %s519, 8
        %s521 = scalar_lea.vmem [#allocation8], %s520
        // Predicated region
        $region81: #{tpu_custom_call.1} parent=67 // pred_check
          %p522 = pneg %p136
        $region82: #{tpu_custom_call.1} parent=67 // pred_check_branch
          %524 = sbr.rel (%p522) target = $region84
        $region83: #{tpu_custom_call.1} parent=67 // pred_region
          %525 = dma.done %s518, 128
        $region84: #{tpu_custom_call.1} parent=67 // pred_fallthru
          _
        // Predicated region
        $region85: #{tpu_custom_call.1} parent=67 // pred_check
          %p526 = pneg %p157
        $region86: #{tpu_custom_call.1} parent=67 // pred_check_branch
          %528 = sbr.rel (%p526) target = $region88
        $region87: #{tpu_custom_call.1} parent=67 // pred_region
          %529 = dma.done [#allocation9], 256
        $region88: #{tpu_custom_call.1} parent=67 // pred_fallthru
          _
        // Predicated region
        $region89: #{tpu_custom_call.1} parent=67 // pred_check
          %p530 = pneg %p199
        $region90: #{tpu_custom_call.1} parent=67 // pred_check_branch
          %532 = sbr.rel (%p530) target = $region92
        $region91: #{tpu_custom_call.1} parent=67 // pred_region
          %533 = dma.done [#allocation12], 256
        $region92: #{tpu_custom_call.1} parent=67 // pred_fallthru
          _
        // Predicated region
        $region93: #{tpu_custom_call.1} parent=67 // pred_check
          %p534 = pneg %p241
        $region94: #{tpu_custom_call.1} parent=67 // pred_check_branch
          %536 = sbr.rel (%p534) target = $region96
        $region95: #{tpu_custom_call.1} parent=67 // pred_region
          %537 = dma.done [#allocation12], 256
        $region96: #{tpu_custom_call.1} parent=67 // pred_fallthru
          _
        // Predicated region
        $region97: #{tpu_custom_call.1} parent=67 // pred_check
          %p538 = pneg %p262
        $region98: #{tpu_custom_call.1} parent=67 // pred_check_branch
          %540 = sbr.rel (%p538) target = $region100
        $region99: #{tpu_custom_call.1} parent=67 // pred_region
          %541 = dma.done [#allocation15], 16
        $region100: #{tpu_custom_call.1} parent=67 // pred_fallthru
          _
        %s542 = sand.u32 %s45, 1
        %s543 = scalar_lea.sflag [#allocation3], %s542
        %s544 = sand.u32 %s45, 1
        %s545 = smul.addr %s544, 4
        %s546 = scalar_lea.vmem [#allocation2], %s545
        %p547 = pneg %p58
        %p548 = pneg %p55
        %s549 = sand.u32 %s37, 1
        %s550 = scalar_lea.sflag [#allocation6], %s549
        %s551 = sand.u32 %s71, 1
        %s552 = smul.addr %s551, 4
        %s553 = scalar_lea.vmem [#allocation5], %s552
        %p554 = pneg %p84
        %p555 = pneg %p81
        %s556 = sand.u32 %s37, 1
        %s557 = scalar_lea.sflag [#allocation6], %s556
        %s558 = sand.u32 %s97, 1
        %s559 = smul.addr %s558, 4
        %s560 = scalar_lea.vmem [#allocation7], %s559
        %p561 = pneg %p110
        %p562 = pneg %p107
        %s563 = sand.u32 %s37, 1
        %s564 = scalar_lea.sflag [#allocation9], %s563
        %s565 = sand.u32 %s123, 1
        %s566 = smul.addr %s565, 8
        %s567 = scalar_lea.vmem [#allocation8], %s566
        %p568 = pneg %p136
        %p569 = pneg %p133
        %p570 = pneg %p157
        %p571 = pneg %p154
        %p572 = pneg %p178
        %p573 = pneg %p175
        %p574 = pneg %p199
        %p575 = pneg %p196
        %p576 = pneg %p220
        %p577 = pneg %p217
        %p578 = pneg %p241
        %p579 = pneg %p238
        %p580 = pneg %p262
        %p581 = pneg %p259
        %p582 = pneg %p283
        %p583 = pneg %p280
        %p584 = pneg %p304
        %p585 = pneg %p301
        %p586 = pneg %p330
        %p587 = pneg %p327
        %s588 = sand.u32 %s317, 1
        %s589 = scalar_lea.sflag [#allocation4], %s588
        %s590 = sand.u32 %s317, 1
        %s591 = smul.addr %s590, 8
        %s592 = scalar_lea.vmem [#allocation16], %s591
        %v594 = vld [vmem:[%s494] sm:$0xf]
        %v595 = vld [vmem:[%s503] sm:$0xf]
        %v596 = vld [vmem:[%s512] sm:$0xf]
        %v597 = vld [vmem:[%s521] sm:$0xff]
        %vm598 = vcmp.eq.f32.partialorder %v597, 0.0
        %v599 = vsel %vm598, -1e+09, 0.0
        %v600 = vld [vmem:[#allocation10] sm:$0xf]
        %v601 = vld [vmem:[#allocation10 + $0x4] sm:$0xf]
        %v602 = vld [vmem:[#allocation10 + $0x8] sm:$0xf]
        %v603 = vld [vmem:[#allocation10 + $0xc] sm:$0xf]
        %v604 = vld [vmem:[%s5] sm:$0x1]
        %v606 = vlaneseq
        %v607 = vshrl.u32 %v606, 7
        %v608 = vsub.s32 0, %v607
        %v609 = vrot.slane %v604, %v608
        %v615 = vunpack.c.l.b16 %v600
        %v616 = vunpack.c.l.b16 %v601
        %v617 = vunpack.c.l.b16 %v602
        %v618 = vunpack.c.l.b16 %v603
        %v619 = vpack.c.b16 %v616, %v615
        %v620 = vpack.c.b16 %v618, %v617
        %vm623 = vcmask 261120
        %v625 = vsel %vm623, %v594, 0
        %627 = vmatprep.subr.bf16.mxu0 0
        %628 = vmatpush1.bf16.msra.mxu0 0
        %629 = vmatprep.subr.bf16.mxu0 0
        %630 = vmatpush1.bf16.msra.mxu0 0
        %631 = vmatprep.subr.bf16.mxu0 0
        %632 = vmatpush1.bf16.msra.mxu0 0
        %633 = vmatprep.subr.bf16.mxu0 0
        %634 = vmatpush1.bf16.msra.mxu0 0
        %635 = vmatprep.subr.bf16.mxu0 0
        %636 = vmatpush1.bf16.msra.mxu0 0
        %637 = vmatprep.subr.bf16.mxu0 0
        %638 = vmatpush1.bf16.msra.mxu0 0
        %639 = vmatprep.subr.bf16.mxu0 0
        %640 = vmatpush1.bf16.msra.mxu0 %v620
        %641 = vmatprep.subr.bf16.mxu0 0
        %642 = vmatpush1.bf16.msra.mxu0 %v619
        %643 = vmatprep.subr.bf16.mxu0 0
        %644 = vmatpush2.bf16.msra.mxu0 0
        %645 = vmatprep.subr.bf16.mxu0 0
        %646 = vmatpush2.bf16.msra.mxu0 0
        %647 = vmatprep.subr.bf16.mxu0 0
        %648 = vmatpush2.bf16.msra.mxu0 0
        %649 = vmatprep.subr.bf16.mxu0 0
        %650 = vmatpush2.bf16.msra.mxu0 0
        %651 = vmatprep.subr.bf16.mxu0 0
        %652 = vmatpush2.bf16.msra.mxu0 0
        %653 = vmatprep.subr.bf16.mxu0 0
        %654 = vmatpush2.bf16.msra.mxu0 0
        %655 = vmatprep.subr.bf16.mxu0 0
        %656 = vmatpush2.bf16.msra.mxu0 0
        %657 = vmatprep.subr.bf16.mxu0 0
        %658 = vmatpush2.bf16.msra.mxu0 0
        %659 = vmatprep.mubr.bf16.mxu0 0
        %660 = vmatmul.mubr.bf16.gmra.mxu0 %v625
        %v661 = vpop.f32.mrf.mxu0
        %v662 = vadd.f32 %v609, %v661
        %v663 = vpop.f32.mrf.mxu0
        %v664 = vpop.f32.mrf.mxu0
        %v665 = vpop.f32.mrf.mxu0
        %666 = vdwg.mxu0
        %v667 = vmul.f32 %v662, 0.35355338
        %v668 = vld [vmem:[#allocation11] sm:$0xf]
        %v669 = vld [vmem:[#allocation11 + $0x4] sm:$0xf]
        %v670 = vld [vmem:[#allocation11 + $0x8] sm:$0xf]
        %v671 = vld [vmem:[#allocation11 + $0xc] sm:$0xf]
        %v672 = vld [vmem:[%s7] sm:$0x1]
        %v674 = vlaneseq
        %v675 = vshrl.u32 %v674, 7
        %v676 = vsub.s32 0, %v675
        %v677 = vrot.slane %v672, %v676
        %v683 = vunpack.c.l.b16 %v668
        %v684 = vunpack.c.l.b16 %v669
        %v685 = vunpack.c.l.b16 %v670
        %v686 = vunpack.c.l.b16 %v671
        %v687 = vpack.c.b16 %v684, %v683
        %v688 = vpack.c.b16 %v686, %v685
        %v692 = vsel %vm623, %v595, 0
        %694 = vmatprep.subr.bf16.mxu0 0
        %695 = vmatpush1.bf16.msra.mxu0 0
        %696 = vmatprep.subr.bf16.mxu0 0
        %697 = vmatpush1.bf16.msra.mxu0 0
        %698 = vmatprep.subr.bf16.mxu0 0
        %699 = vmatpush1.bf16.msra.mxu0 0
        %700 = vmatprep.subr.bf16.mxu0 0
        %701 = vmatpush1.bf16.msra.mxu0 0
        %702 = vmatprep.subr.bf16.mxu0 0
        %703 = vmatpush1.bf16.msra.mxu0 0
        %704 = vmatprep.subr.bf16.mxu0 0
        %705 = vmatpush1.bf16.msra.mxu0 0
        %706 = vmatprep.subr.bf16.mxu0 0
        %707 = vmatpush1.bf16.msra.mxu0 %v688
        %708 = vmatprep.subr.bf16.mxu0 0
        %709 = vmatpush1.bf16.msra.mxu0 %v687
        %710 = vmatprep.subr.bf16.mxu0 0
        %711 = vmatpush2.bf16.msra.mxu0 0
        %712 = vmatprep.subr.bf16.mxu0 0
        %713 = vmatpush2.bf16.msra.mxu0 0
        %714 = vmatprep.subr.bf16.mxu0 0
        %715 = vmatpush2.bf16.msra.mxu0 0
        %716 = vmatprep.subr.bf16.mxu0 0
        %717 = vmatpush2.bf16.msra.mxu0 0
        %718 = vmatprep.subr.bf16.mxu0 0
        %719 = vmatpush2.bf16.msra.mxu0 0
        %720 = vmatprep.subr.bf16.mxu0 0
        %721 = vmatpush2.bf16.msra.mxu0 0
        %722 = vmatprep.subr.bf16.mxu0 0
        %723 = vmatpush2.bf16.msra.mxu0 0
        %724 = vmatprep.subr.bf16.mxu0 0
        %725 = vmatpush2.bf16.msra.mxu0 0
        %726 = vmatprep.mubr.bf16.mxu0 0
        %727 = vmatmul.mubr.bf16.gmra.mxu0 %v692
        %v728 = vpop.f32.mrf.mxu0
        %v729 = vadd.f32 %v677, %v728
        %v730 = vpop.f32.mrf.mxu0
        %v731 = vpop.f32.mrf.mxu0
        %v732 = vpop.f32.mrf.mxu0
        %733 = vdwg.mxu0
        %v734 = vld [vmem:[#allocation13] sm:$0xf]
        %v735 = vld [vmem:[#allocation13 + $0x4] sm:$0xf]
        %v736 = vld [vmem:[#allocation13 + $0x8] sm:$0xf]
        %v737 = vld [vmem:[#allocation13 + $0xc] sm:$0xf]
        %v738 = vld [vmem:[#allocation14] sm:$0x1]
        %v740 = vlaneseq
        %v741 = vshrl.u32 %v740, 7
        %v742 = vsub.s32 0, %v741
        %v743 = vrot.slane %v738, %v742
        %v749 = vunpack.c.l.b16 %v734
        %v750 = vunpack.c.l.b16 %v735
        %v751 = vunpack.c.l.b16 %v736
        %v752 = vunpack.c.l.b16 %v737
        %v753 = vpack.c.b16 %v750, %v749
        %v754 = vpack.c.b16 %v752, %v751
        %v758 = vsel %vm623, %v596, 0
        %760 = vmatprep.subr.bf16.mxu0 0
        %761 = vmatpush1.bf16.msra.mxu0 0
        %762 = vmatprep.subr.bf16.mxu0 0
        %763 = vmatpush1.bf16.msra.mxu0 0
        %764 = vmatprep.subr.bf16.mxu0 0
        %765 = vmatpush1.bf16.msra.mxu0 0
        %766 = vmatprep.subr.bf16.mxu0 0
        %767 = vmatpush1.bf16.msra.mxu0 0
        %768 = vmatprep.subr.bf16.mxu0 0
        %769 = vmatpush1.bf16.msra.mxu0 0
        %770 = vmatprep.subr.bf16.mxu0 0
        %771 = vmatpush1.bf16.msra.mxu0 0
        %772 = vmatprep.subr.bf16.mxu0 0
        %773 = vmatpush1.bf16.msra.mxu0 %v754
        %774 = vmatprep.subr.bf16.mxu0 0
        %775 = vmatpush1.bf16.msra.mxu0 %v753
        %776 = vmatprep.subr.bf16.mxu0 0
        %777 = vmatpush2.bf16.msra.mxu0 0
        %778 = vmatprep.subr.bf16.mxu0 0
        %779 = vmatpush2.bf16.msra.mxu0 0
        %780 = vmatprep.subr.bf16.mxu0 0
        %781 = vmatpush2.bf16.msra.mxu0 0
        %782 = vmatprep.subr.bf16.mxu0 0
        %783 = vmatpush2.bf16.msra.mxu0 0
        %784 = vmatprep.subr.bf16.mxu0 0
        %785 = vmatpush2.bf16.msra.mxu0 0
        %786 = vmatprep.subr.bf16.mxu0 0
        %787 = vmatpush2.bf16.msra.mxu0 0
        %788 = vmatprep.subr.bf16.mxu0 0
        %789 = vmatpush2.bf16.msra.mxu0 0
        %790 = vmatprep.subr.bf16.mxu0 0
        %791 = vmatpush2.bf16.msra.mxu0 0
        %792 = vmatprep.mubr.bf16.mxu0 0
        %793 = vmatmul.mubr.bf16.gmra.mxu0 %v758
        %v794 = vpop.f32.mrf.mxu0
        %v795 = vadd.f32 %v743, %v794
        %v796 = vpop.f32.mrf.mxu0
        %v797 = vpop.f32.mrf.mxu0
        %v798 = vpop.f32.mrf.mxu0
        %799 = vdwg.mxu0
        %v800 = vld [vmem:[%s11] sm:$0x1]
        %v802 = vlaneseq
        %v803 = vshrl.u32 %v802, 7
        %v804 = vsub.s32 0, %v803
        %v805 = vrot.slane %v800, %v804
        %v807 = vpack.c.bf16 %v667, %v667
        %v808 = vpack.c.bf16 %v729, %v729
        %v809 = vpack.c.bf16 %v795, %v795
        %vm810 = vcmask 64512
        %v812 = vsel %vm810, %v807, 0
        %v815 = vsel %vm810, %v808, 0
        %817 = vmatprep.subr.bf16.mxu0 0
        %818 = vmatpush1.bf16.xpose.msra.mxu0 0
        %819 = vmatprep.subr.bf16.mxu0 0
        %820 = vmatpush1.bf16.xpose.msra.mxu0 0
        %821 = vmatprep.subr.bf16.mxu0 0
        %822 = vmatpush1.bf16.xpose.msra.mxu0 0
        %823 = vmatprep.subr.bf16.mxu0 0
        %824 = vmatpush1.bf16.xpose.msra.mxu0 0
        %825 = vmatprep.subr.bf16.mxu0 0
        %826 = vmatpush1.bf16.xpose.msra.mxu0 0
        %827 = vmatprep.subr.bf16.mxu0 0
        %828 = vmatpush1.bf16.xpose.msra.mxu0 0
        %829 = vmatprep.subr.bf16.mxu0 0
        %830 = vmatpush1.bf16.xpose.msra.mxu0 0
        %831 = vmatprep.subr.bf16.mxu0 0
        %832 = vmatpush1.bf16.xpose.msra.mxu0 %v815
        %833 = vmatprep.subr.bf16.mxu0 0
        %834 = vmatpush2.bf16.xpose.msra.mxu0 0
        %835 = vmatprep.subr.bf16.mxu0 0
        %836 = vmatpush2.bf16.xpose.msra.mxu0 0
        %837 = vmatprep.subr.bf16.mxu0 0
        %838 = vmatpush2.bf16.xpose.msra.mxu0 0
        %839 = vmatprep.subr.bf16.mxu0 0
        %840 = vmatpush2.bf16.xpose.msra.mxu0 0
        %841 = vmatprep.subr.bf16.mxu0 0
        %842 = vmatpush2.bf16.xpose.msra.mxu0 0
        %843 = vmatprep.subr.bf16.mxu0 0
        %844 = vmatpush2.bf16.xpose.msra.mxu0 0
        %845 = vmatprep.subr.bf16.mxu0 0
        %846 = vmatpush2.bf16.xpose.msra.mxu0 0
        %847 = vmatprep.subr.bf16.mxu0 0
        %848 = vmatpush2.bf16.xpose.msra.mxu0 0
        %849 = vmatprep.mubr.bf16.mxu0 0
        %850 = vmatmul.mubr.bf16.gmra.mxu0 %v812
        %v851 = vpop.f32.mrf.mxu0
        %v852 = vadd.f32 %v599, %v851
        %v853 = vpop.f32.mrf.mxu0
        %v854 = vpop.f32.mrf.mxu0
        %v855 = vpop.f32.mrf.mxu0
        %856 = vdwg.mxu0
        %v857 = vsel %vm810, %v852, -inf
        %858 = vmax.xlane.f32.xlu0 %v857
        %v859 = vpop.xlane.xlu0 %858
        %v860 = vsub.f32 %v852, %v859
        %v861 = vmul.f32 %v860, 1.442695
        %v862 = vpow.pop %v861
        %v863 = vsel %vm810, %v862, 0.0
        %864 = vadd.xlane.f32.xlu0 %v863
        %v865 = vpop.xlane.xlu0 %864
        %v866 = vrcp.pop %v865
        %v867 = vmul.f32 %v862, %v866
        %v868 = vpack.c.bf16 %v867, %v867
        %v870 = vsel %vm810, %v868, 0
        %vm872 = vcmask 1043456
        %v874 = vsel %vm872, %v809, 0
        %876 = vmatprep.subr.bf16.mxu0 0
        %877 = vmatpush1.bf16.msra.mxu0 0
        %878 = vmatprep.subr.bf16.mxu0 0
        %879 = vmatpush1.bf16.msra.mxu0 0
        %880 = vmatprep.subr.bf16.mxu0 0
        %881 = vmatpush1.bf16.msra.mxu0 0
        %882 = vmatprep.subr.bf16.mxu0 0
        %883 = vmatpush1.bf16.msra.mxu0 0
        %884 = vmatprep.subr.bf16.mxu0 0
        %885 = vmatpush1.bf16.msra.mxu0 0
        %886 = vmatprep.subr.bf16.mxu0 0
        %887 = vmatpush1.bf16.msra.mxu0 0
        %888 = vmatprep.subr.bf16.mxu0 0
        %889 = vmatpush1.bf16.msra.mxu0 0
        %890 = vmatprep.subr.bf16.mxu0 0
        %891 = vmatpush1.bf16.msra.mxu0 %v874
        %892 = vmatprep.subr.bf16.mxu0 0
        %893 = vmatpush2.bf16.msra.mxu0 0
        %894 = vmatprep.subr.bf16.mxu0 0
        %895 = vmatpush2.bf16.msra.mxu0 0
        %896 = vmatprep.subr.bf16.mxu0 0
        %897 = vmatpush2.bf16.msra.mxu0 0
        %898 = vmatprep.subr.bf16.mxu0 0
        %899 = vmatpush2.bf16.msra.mxu0 0
        %900 = vmatprep.subr.bf16.mxu0 0
        %901 = vmatpush2.bf16.msra.mxu0 0
        %902 = vmatprep.subr.bf16.mxu0 0
        %903 = vmatpush2.bf16.msra.mxu0 0
        %904 = vmatprep.subr.bf16.mxu0 0
        %905 = vmatpush2.bf16.msra.mxu0 0
        %906 = vmatprep.subr.bf16.mxu0 0
        %907 = vmatpush2.bf16.msra.mxu0 0
        %908 = vmatprep.mubr.bf16.mxu0 0
        %909 = vmatmul.mubr.bf16.gmra.mxu0 %v870
        %v910 = vpop.f32.mrf.mxu0
        %v911 = vadd.f32 0.0, %v910
        %v912 = vpop.f32.mrf.mxu0
        %v913 = vpop.f32.mrf.mxu0
        %v914 = vpop.f32.mrf.mxu0
        %915 = vdwg.mxu0
        %v916 = vpack.c.bf16 %v911, %v911
        %v917 = vld [vmem:[%s10] sm:$0xf]
        %v919 = vsel %vm810, %v916, 0
        %v922 = vsel %vm872, %v917, 0
        %924 = vmatprep.subr.bf16.mxu0 0
        %925 = vmatpush1.bf16.msra.mxu0 0
        %926 = vmatprep.subr.bf16.mxu0 0
        %927 = vmatpush1.bf16.msra.mxu0 0
        %928 = vmatprep.subr.bf16.mxu0 0
        %929 = vmatpush1.bf16.msra.mxu0 0
        %930 = vmatprep.subr.bf16.mxu0 0
        %931 = vmatpush1.bf16.msra.mxu0 0
        %932 = vmatprep.subr.bf16.mxu0 0
        %933 = vmatpush1.bf16.msra.mxu0 0
        %934 = vmatprep.subr.bf16.mxu0 0
        %935 = vmatpush1.bf16.msra.mxu0 0
        %936 = vmatprep.subr.bf16.mxu0 0
        %937 = vmatpush1.bf16.msra.mxu0 0
        %938 = vmatprep.subr.bf16.mxu0 0
        %939 = vmatpush1.bf16.msra.mxu0 %v922
        %940 = vmatprep.subr.bf16.mxu0 0
        %941 = vmatpush2.bf16.msra.mxu0 0
        %942 = vmatprep.subr.bf16.mxu0 0
        %943 = vmatpush2.bf16.msra.mxu0 0
        %944 = vmatprep.subr.bf16.mxu0 0
        %945 = vmatpush2.bf16.msra.mxu0 0
        %946 = vmatprep.subr.bf16.mxu0 0
        %947 = vmatpush2.bf16.msra.mxu0 0
        %948 = vmatprep.subr.bf16.mxu0 0
        %949 = vmatpush2.bf16.msra.mxu0 0
        %950 = vmatprep.subr.bf16.mxu0 0
        %951 = vmatpush2.bf16.msra.mxu0 0
        %952 = vmatprep.subr.bf16.mxu0 0
        %953 = vmatpush2.bf16.msra.mxu0 0
        %954 = vmatprep.subr.bf16.mxu0 0
        %955 = vmatpush2.bf16.msra.mxu0 0
        %956 = vmatprep.mubr.bf16.mxu0 0
        %957 = vmatmul.mubr.bf16.gmra.mxu0 %v919
        %v958 = vpop.f32.mrf.mxu0
        %v959 = vadd.f32 0.0, %v958
        %v960 = vpop.f32.mrf.mxu0
        %v961 = vpop.f32.mrf.mxu0
        %v962 = vpop.f32.mrf.mxu0
        %963 = vdwg.mxu0
        %v964 = vadd.f32 %v805, %v959
        %966 = vrot.lane.b32.xlu0 %v807, 120
        %v967 = vpop.permute.xlu0 %966
        %969 = vrot.lane.b32.xlu0 %v808, 120
        %v970 = vpop.permute.xlu0 %969
        %v972 = vsel %vm810, %v967, 0
        %v975 = vsel %vm810, %v970, 0
        %977 = vmatprep.subr.bf16.mxu0 0
        %978 = vmatpush1.bf16.xpose.msra.mxu0 0
        %979 = vmatprep.subr.bf16.mxu0 0
        %980 = vmatpush1.bf16.xpose.msra.mxu0 0
        %981 = vmatprep.subr.bf16.mxu0 0
        %982 = vmatpush1.bf16.xpose.msra.mxu0 0
        %983 = vmatprep.subr.bf16.mxu0 0
        %984 = vmatpush1.bf16.xpose.msra.mxu0 0
        %985 = vmatprep.subr.bf16.mxu0 0
        %986 = vmatpush1.bf16.xpose.msra.mxu0 0
        %987 = vmatprep.subr.bf16.mxu0 0
        %988 = vmatpush1.bf16.xpose.msra.mxu0 0
        %989 = vmatprep.subr.bf16.mxu0 0
        %990 = vmatpush1.bf16.xpose.msra.mxu0 0
        %991 = vmatprep.subr.bf16.mxu0 0
        %992 = vmatpush1.bf16.xpose.msra.mxu0 %v975
        %993 = vmatprep.subr.bf16.mxu0 0
        %994 = vmatpush2.bf16.xpose.msra.mxu0 0
        %995 = vmatprep.subr.bf16.mxu0 0
        %996 = vmatpush2.bf16.xpose.msra.mxu0 0
        %997 = vmatprep.subr.bf16.mxu0 0
        %998 = vmatpush2.bf16.xpose.msra.mxu0 0
        %999 = vmatprep.subr.bf16.mxu0 0
        %1000 = vmatpush2.bf16.xpose.msra.mxu0 0
        %1001 = vmatprep.subr.bf16.mxu0 0
        %1002 = vmatpush2.bf16.xpose.msra.mxu0 0
        %1003 = vmatprep.subr.bf16.mxu0 0
        %1004 = vmatpush2.bf16.xpose.msra.mxu0 0
        %1005 = vmatprep.subr.bf16.mxu0 0
        %1006 = vmatpush2.bf16.xpose.msra.mxu0 0
        %1007 = vmatprep.subr.bf16.mxu0 0
        %1008 = vmatpush2.bf16.xpose.msra.mxu0 0
        %1009 = vmatprep.mubr.bf16.mxu0 0
        %1010 = vmatmul.mubr.bf16.gmra.mxu0 %v972
        %v1011 = vpop.f32.mrf.mxu0
        %v1012 = vadd.f32 %v599, %v1011
        %v1013 = vpop.f32.mrf.mxu0
        %v1014 = vpop.f32.mrf.mxu0
        %v1015 = vpop.f32.mrf.mxu0
        %1016 = vdwg.mxu0
        %v1017 = vsel %vm810, %v1012, -inf
        %1018 = vmax.xlane.f32.xlu0 %v1017
        %v1019 = vpop.xlane.xlu0 %1018
        %v1020 = vsub.f32 %v1012, %v1019
        %v1021 = vmul.f32 %v1020, 1.442695
        %v1022 = vpow.pop %v1021
        %v1023 = vsel %vm810, %v1022, 0.0
        %1024 = vadd.xlane.f32.xlu0 %v1023
        %v1025 = vpop.xlane.xlu0 %1024
        %v1026 = vrcp.pop %v1025
        %v1027 = vmul.f32 %v1022, %v1026
        %v1028 = vpack.c.bf16 %v1027, %v1027
        %1030 = vrot.lane.b32.xlu0 %v809, 120
        %v1031 = vpop.permute.xlu0 %1030
        %v1033 = vsel %vm810, %v1028, 0
        %v1036 = vsel %vm872, %v1031, 0
        %1038 = vmatprep.subr.bf16.mxu0 0
        %1039 = vmatpush1.bf16.msra.mxu0 0
        %1040 = vmatprep.subr.bf16.mxu0 0
        %1041 = vmatpush1.bf16.msra.mxu0 0
        %1042 = vmatprep.subr.bf16.mxu0 0
        %1043 = vmatpush1.bf16.msra.mxu0 0
        %1044 = vmatprep.subr.bf16.mxu0 0
        %1045 = vmatpush1.bf16.msra.mxu0 0
        %1046 = vmatprep.subr.bf16.mxu0 0
        %1047 = vmatpush1.bf16.msra.mxu0 0
        %1048 = vmatprep.subr.bf16.mxu0 0
        %1049 = vmatpush1.bf16.msra.mxu0 0
        %1050 = vmatprep.subr.bf16.mxu0 0
        %1051 = vmatpush1.bf16.msra.mxu0 0
        %1052 = vmatprep.subr.bf16.mxu0 0
        %1053 = vmatpush1.bf16.msra.mxu0 %v1036
        %1054 = vmatprep.subr.bf16.mxu0 0
        %1055 = vmatpush2.bf16.msra.mxu0 0
        %1056 = vmatprep.subr.bf16.mxu0 0
        %1057 = vmatpush2.bf16.msra.mxu0 0
        %1058 = vmatprep.subr.bf16.mxu0 0
        %1059 = vmatpush2.bf16.msra.mxu0 0
        %1060 = vmatprep.subr.bf16.mxu0 0
        %1061 = vmatpush2.bf16.msra.mxu0 0
        %1062 = vmatprep.subr.bf16.mxu0 0
        %1063 = vmatpush2.bf16.msra.mxu0 0
        %1064 = vmatprep.subr.bf16.mxu0 0
        %1065 = vmatpush2.bf16.msra.mxu0 0
        %1066 = vmatprep.subr.bf16.mxu0 0
        %1067 = vmatpush2.bf16.msra.mxu0 0
        %1068 = vmatprep.subr.bf16.mxu0 0
        %1069 = vmatpush2.bf16.msra.mxu0 0
        %1070 = vmatprep.mubr.bf16.mxu0 0
        %1071 = vmatmul.mubr.bf16.gmra.mxu0 %v1033
        %v1072 = vpop.f32.mrf.mxu0
        %v1073 = vadd.f32 0.0, %v1072
        %v1074 = vpop.f32.mrf.mxu0
        %v1075 = vpop.f32.mrf.mxu0
        %v1076 = vpop.f32.mrf.mxu0
        %1077 = vdwg.mxu0
        %v1078 = vpack.c.bf16 %v1073, %v1073
        %v1079 = vld [vmem:[%s10 + $0x4] sm:$0xf]
        %v1081 = vsel %vm810, %v1078, 0
        %v1084 = vsel %vm872, %v1079, 0
        %1086 = vmatprep.subr.bf16.mxu0 0
        %1087 = vmatpush1.bf16.msra.mxu0 0
        %1088 = vmatprep.subr.bf16.mxu0 0
        %1089 = vmatpush1.bf16.msra.mxu0 0
        %1090 = vmatprep.subr.bf16.mxu0 0
        %1091 = vmatpush1.bf16.msra.mxu0 0
        %1092 = vmatprep.subr.bf16.mxu0 0
        %1093 = vmatpush1.bf16.msra.mxu0 0
        %1094 = vmatprep.subr.bf16.mxu0 0
        %1095 = vmatpush1.bf16.msra.mxu0 0
        %1096 = vmatprep.subr.bf16.mxu0 0
        %1097 = vmatpush1.bf16.msra.mxu0 0
        %1098 = vmatprep.subr.bf16.mxu0 0
        %1099 = vmatpush1.bf16.msra.mxu0 0
        %1100 = vmatprep.subr.bf16.mxu0 0
        %1101 = vmatpush1.bf16.msra.mxu0 %v1084
        %1102 = vmatprep.subr.bf16.mxu0 0
        %1103 = vmatpush2.bf16.msra.mxu0 0
        %1104 = vmatprep.subr.bf16.mxu0 0
        %1105 = vmatpush2.bf16.msra.mxu0 0
        %1106 = vmatprep.subr.bf16.mxu0 0
        %1107 = vmatpush2.bf16.msra.mxu0 0
        %1108 = vmatprep.subr.bf16.mxu0 0
        %1109 = vmatpush2.bf16.msra.mxu0 0
        %1110 = vmatprep.subr.bf16.mxu0 0
        %1111 = vmatpush2.bf16.msra.mxu0 0
        %1112 = vmatprep.subr.bf16.mxu0 0
        %1113 = vmatpush2.bf16.msra.mxu0 0
        %1114 = vmatprep.subr.bf16.mxu0 0
        %1115 = vmatpush2.bf16.msra.mxu0 0
        %1116 = vmatprep.subr.bf16.mxu0 0
        %1117 = vmatpush2.bf16.msra.mxu0 0
        %1118 = vmatprep.mubr.bf16.mxu0 0
        %1119 = vmatmul.mubr.bf16.gmra.mxu0 %v1081
        %v1120 = vpop.f32.mrf.mxu0
        %v1121 = vadd.f32 0.0, %v1120
        %v1122 = vpop.f32.mrf.mxu0
        %v1123 = vpop.f32.mrf.mxu0
        %v1124 = vpop.f32.mrf.mxu0
        %1125 = vdwg.mxu0
        %v1126 = vadd.f32 %v964, %v1121
        %1127 = vrot.lane.b32.xlu0 %v807, 112
        %v1128 = vpop.permute.xlu0 %1127
        %1129 = vrot.lane.b32.xlu0 %v808, 112
        %v1130 = vpop.permute.xlu0 %1129
        %v1132 = vsel %vm810, %v1128, 0
        %v1135 = vsel %vm810, %v1130, 0
        %1137 = vmatprep.subr.bf16.mxu0 0
        %1138 = vmatpush1.bf16.xpose.msra.mxu0 0
        %1139 = vmatprep.subr.bf16.mxu0 0
        %1140 = vmatpush1.bf16.xpose.msra.mxu0 0
        %1141 = vmatprep.subr.bf16.mxu0 0
        %1142 = vmatpush1.bf16.xpose.msra.mxu0 0
        %1143 = vmatprep.subr.bf16.mxu0 0
        %1144 = vmatpush1.bf16.xpose.msra.mxu0 0
        %1145 = vmatprep.subr.bf16.mxu0 0
        %1146 = vmatpush1.bf16.xpose.msra.mxu0 0
        %1147 = vmatprep.subr.bf16.mxu0 0
        %1148 = vmatpush1.bf16.xpose.msra.mxu0 0
        %1149 = vmatprep.subr.bf16.mxu0 0
        %1150 = vmatpush1.bf16.xpose.msra.mxu0 0
        %1151 = vmatprep.subr.bf16.mxu0 0
        %1152 = vmatpush1.bf16.xpose.msra.mxu0 %v1135
        %1153 = vmatprep.subr.bf16.mxu0 0
        %1154 = vmatpush2.bf16.xpose.msra.mxu0 0
        %1155 = vmatprep.subr.bf16.mxu0 0
        %1156 = vmatpush2.bf16.xpose.msra.mxu0 0
        %1157 = vmatprep.subr.bf16.mxu0 0
        %1158 = vmatpush2.bf16.xpose.msra.mxu0 0
        %1159 = vmatprep.subr.bf16.mxu0 0
        %1160 = vmatpush2.bf16.xpose.msra.mxu0 0
        %1161 = vmatprep.subr.bf16.mxu0 0
        %1162 = vmatpush2.bf16.xpose.msra.mxu0 0
        %1163 = vmatprep.subr.bf16.mxu0 0
        %1164 = vmatpush2.bf16.xpose.msra.mxu0 0
        %1165 = vmatprep.subr.bf16.mxu0 0
        %1166 = vmatpush2.bf16.xpose.msra.mxu0 0
        %1167 = vmatprep.subr.bf16.mxu0 0
        %1168 = vmatpush2.bf16.xpose.msra.mxu0 0
        %1169 = vmatprep.mubr.bf16.mxu0 0
        %1170 = vmatmul.mubr.bf16.gmra.mxu0 %v1132
        %v1171 = vpop.f32.mrf.mxu0
        %v1172 = vadd.f32 %v599, %v1171
        %v1173 = vpop.f32.mrf.mxu0
        %v1174 = vpop.f32.mrf.mxu0
        %v1175 = vpop.f32.mrf.mxu0
        %1176 = vdwg.mxu0
        %v1177 = vsel %vm810, %v1172, -inf
        %1178 = vmax.xlane.f32.xlu0 %v1177
        %v1179 = vpop.xlane.xlu0 %1178
        %v1180 = vsub.f32 %v1172, %v1179
        %v1181 = vmul.f32 %v1180, 1.442695
        %v1182 = vpow.pop %v1181
        %v1183 = vsel %vm810, %v1182, 0.0
        %1184 = vadd.xlane.f32.xlu0 %v1183
        %v1185 = vpop.xlane.xlu0 %1184
        %v1186 = vrcp.pop %v1185
        %v1187 = vmul.f32 %v1182, %v1186
        %v1188 = vpack.c.bf16 %v1187, %v1187
        %1189 = vrot.lane.b32.xlu0 %v809, 112
        %v1190 = vpop.permute.xlu0 %1189
        %v1192 = vsel %vm810, %v1188, 0
        %v1195 = vsel %vm872, %v1190, 0
        %1197 = vmatprep.subr.bf16.mxu0 0
        %1198 = vmatpush1.bf16.msra.mxu0 0
        %1199 = vmatprep.subr.bf16.mxu0 0
        %1200 = vmatpush1.bf16.msra.mxu0 0
        %1201 = vmatprep.subr.bf16.mxu0 0
        %1202 = vmatpush1.bf16.msra.mxu0 0
        %1203 = vmatprep.subr.bf16.mxu0 0
        %1204 = vmatpush1.bf16.msra.mxu0 0
        %1205 = vmatprep.subr.bf16.mxu0 0
        %1206 = vmatpush1.bf16.msra.mxu0 0
        %1207 = vmatprep.subr.bf16.mxu0 0
        %1208 = vmatpush1.bf16.msra.mxu0 0
        %1209 = vmatprep.subr.bf16.mxu0 0
        %1210 = vmatpush1.bf16.msra.mxu0 0
        %1211 = vmatprep.subr.bf16.mxu0 0
        %1212 = vmatpush1.bf16.msra.mxu0 %v1195
        %1213 = vmatprep.subr.bf16.mxu0 0
        %1214 = vmatpush2.bf16.msra.mxu0 0
        %1215 = vmatprep.subr.bf16.mxu0 0
        %1216 = vmatpush2.bf16.msra.mxu0 0
        %1217 = vmatprep.subr.bf16.mxu0 0
        %1218 = vmatpush2.bf16.msra.mxu0 0
        %1219 = vmatprep.subr.bf16.mxu0 0
        %1220 = vmatpush2.bf16.msra.mxu0 0
        %1221 = vmatprep.subr.bf16.mxu0 0
        %1222 = vmatpush2.bf16.msra.mxu0 0
        %1223 = vmatprep.subr.bf16.mxu0 0
        %1224 = vmatpush2.bf16.msra.mxu0 0
        %1225 = vmatprep.subr.bf16.mxu0 0
        %1226 = vmatpush2.bf16.msra.mxu0 0
        %1227 = vmatprep.subr.bf16.mxu0 0
        %1228 = vmatpush2.bf16.msra.mxu0 0
        %1229 = vmatprep.mubr.bf16.mxu0 0
        %1230 = vmatmul.mubr.bf16.gmra.mxu0 %v1192
        %v1231 = vpop.f32.mrf.mxu0
        %v1232 = vadd.f32 0.0, %v1231
        %v1233 = vpop.f32.mrf.mxu0
        %v1234 = vpop.f32.mrf.mxu0
        %v1235 = vpop.f32.mrf.mxu0
        %1236 = vdwg.mxu0
        %v1237 = vpack.c.bf16 %v1232, %v1232
        %v1238 = vld [vmem:[%s10 + $0x8] sm:$0xf]
        %v1240 = vsel %vm810, %v1237, 0
        %v1243 = vsel %vm872, %v1238, 0
        %1245 = vmatprep.subr.bf16.mxu0 0
        %1246 = vmatpush1.bf16.msra.mxu0 0
        %1247 = vmatprep.subr.bf16.mxu0 0
        %1248 = vmatpush1.bf16.msra.mxu0 0
        %1249 = vmatprep.subr.bf16.mxu0 0
        %1250 = vmatpush1.bf16.msra.mxu0 0
        %1251 = vmatprep.subr.bf16.mxu0 0
        %1252 = vmatpush1.bf16.msra.mxu0 0
        %1253 = vmatprep.subr.bf16.mxu0 0
        %1254 = vmatpush1.bf16.msra.mxu0 0
        %1255 = vmatprep.subr.bf16.mxu0 0
        %1256 = vmatpush1.bf16.msra.mxu0 0
        %1257 = vmatprep.subr.bf16.mxu0 0
        %1258 = vmatpush1.bf16.msra.mxu0 0
        %1259 = vmatprep.subr.bf16.mxu0 0
        %1260 = vmatpush1.bf16.msra.mxu0 %v1243
        %1261 = vmatprep.subr.bf16.mxu0 0
        %1262 = vmatpush2.bf16.msra.mxu0 0
        %1263 = vmatprep.subr.bf16.mxu0 0
        %1264 = vmatpush2.bf16.msra.mxu0 0
        %1265 = vmatprep.subr.bf16.mxu0 0
        %1266 = vmatpush2.bf16.msra.mxu0 0
        %1267 = vmatprep.subr.bf16.mxu0 0
        %1268 = vmatpush2.bf16.msra.mxu0 0
        %1269 = vmatprep.subr.bf16.mxu0 0
        %1270 = vmatpush2.bf16.msra.mxu0 0
        %1271 = vmatprep.subr.bf16.mxu0 0
        %1272 = vmatpush2.bf16.msra.mxu0 0
        %1273 = vmatprep.subr.bf16.mxu0 0
        %1274 = vmatpush2.bf16.msra.mxu0 0
        %1275 = vmatprep.subr.bf16.mxu0 0
        %1276 = vmatpush2.bf16.msra.mxu0 0
        %1277 = vmatprep.mubr.bf16.mxu0 0
        %1278 = vmatmul.mubr.bf16.gmra.mxu0 %v1240
        %v1279 = vpop.f32.mrf.mxu0
        %v1280 = vadd.f32 0.0, %v1279
        %v1281 = vpop.f32.mrf.mxu0
        %v1282 = vpop.f32.mrf.mxu0
        %v1283 = vpop.f32.mrf.mxu0
        %1284 = vdwg.mxu0
        %v1285 = vadd.f32 %v1126, %v1280
        %1286 = vrot.lane.b32.xlu0 %v807, 104
        %v1287 = vpop.permute.xlu0 %1286
        %1288 = vrot.lane.b32.xlu0 %v808, 104
        %v1289 = vpop.permute.xlu0 %1288
        %v1291 = vsel %vm810, %v1287, 0
        %v1294 = vsel %vm810, %v1289, 0
        %1296 = vmatprep.subr.bf16.mxu0 0
        %1297 = vmatpush1.bf16.xpose.msra.mxu0 0
        %1298 = vmatprep.subr.bf16.mxu0 0
        %1299 = vmatpush1.bf16.xpose.msra.mxu0 0
        %1300 = vmatprep.subr.bf16.mxu0 0
        %1301 = vmatpush1.bf16.xpose.msra.mxu0 0
        %1302 = vmatprep.subr.bf16.mxu0 0
        %1303 = vmatpush1.bf16.xpose.msra.mxu0 0
        %1304 = vmatprep.subr.bf16.mxu0 0
        %1305 = vmatpush1.bf16.xpose.msra.mxu0 0
        %1306 = vmatprep.subr.bf16.mxu0 0
        %1307 = vmatpush1.bf16.xpose.msra.mxu0 0
        %1308 = vmatprep.subr.bf16.mxu0 0
        %1309 = vmatpush1.bf16.xpose.msra.mxu0 0
        %1310 = vmatprep.subr.bf16.mxu0 0
        %1311 = vmatpush1.bf16.xpose.msra.mxu0 %v1294
        %1312 = vmatprep.subr.bf16.mxu0 0
        %1313 = vmatpush2.bf16.xpose.msra.mxu0 0
        %1314 = vmatprep.subr.bf16.mxu0 0
        %1315 = vmatpush2.bf16.xpose.msra.mxu0 0
        %1316 = vmatprep.subr.bf16.mxu0 0
        %1317 = vmatpush2.bf16.xpose.msra.mxu0 0
        %1318 = vmatprep.subr.bf16.mxu0 0
        %1319 = vmatpush2.bf16.xpose.msra.mxu0 0
        %1320 = vmatprep.subr.bf16.mxu0 0
        %1321 = vmatpush2.bf16.xpose.msra.mxu0 0
        %1322 = vmatprep.subr.bf16.mxu0 0
        %1323 = vmatpush2.bf16.xpose.msra.mxu0 0
        %1324 = vmatprep.subr.bf16.mxu0 0
        %1325 = vmatpush2.bf16.xpose.msra.mxu0 0
        %1326 = vmatprep.subr.bf16.mxu0 0
        %1327 = vmatpush2.bf16.xpose.msra.mxu0 0
        %1328 = vmatprep.mubr.bf16.mxu0 0
        %1329 = vmatmul.mubr.bf16.gmra.mxu0 %v1291
        %v1330 = vpop.f32.mrf.mxu0
        %v1331 = vadd.f32 %v599, %v1330
        %v1332 = vpop.f32.mrf.mxu0
        %v1333 = vpop.f32.mrf.mxu0
        %v1334 = vpop.f32.mrf.mxu0
        %1335 = vdwg.mxu0
        %v1336 = vsel %vm810, %v1331, -inf
        %1337 = vmax.xlane.f32.xlu0 %v1336
        %v1338 = vpop.xlane.xlu0 %1337
        %v1339 = vsub.f32 %v1331, %v1338
        %v1340 = vmul.f32 %v1339, 1.442695
        %v1341 = vpow.pop %v1340
        %v1342 = vsel %vm810, %v1341, 0.0
        %1343 = vadd.xlane.f32.xlu0 %v1342
        %v1344 = vpop.xlane.xlu0 %1343
        %v1345 = vrcp.pop %v1344
        %v1346 = vmul.f32 %v1341, %v1345
        %v1347 = vpack.c.bf16 %v1346, %v1346
        %1348 = vrot.lane.b32.xlu0 %v809, 104
        %v1349 = vpop.permute.xlu0 %1348
        %v1351 = vsel %vm810, %v1347, 0
        %v1354 = vsel %vm872, %v1349, 0
        %1356 = vmatprep.subr.bf16.mxu0 0
        %1357 = vmatpush1.bf16.msra.mxu0 0
        %1358 = vmatprep.subr.bf16.mxu0 0
        %1359 = vmatpush1.bf16.msra.mxu0 0
        %1360 = vmatprep.subr.bf16.mxu0 0
        %1361 = vmatpush1.bf16.msra.mxu0 0
        %1362 = vmatprep.subr.bf16.mxu0 0
        %1363 = vmatpush1.bf16.msra.mxu0 0
        %1364 = vmatprep.subr.bf16.mxu0 0
        %1365 = vmatpush1.bf16.msra.mxu0 0
        %1366 = vmatprep.subr.bf16.mxu0 0
        %1367 = vmatpush1.bf16.msra.mxu0 0
        %1368 = vmatprep.subr.bf16.mxu0 0
        %1369 = vmatpush1.bf16.msra.mxu0 0
        %1370 = vmatprep.subr.bf16.mxu0 0
        %1371 = vmatpush1.bf16.msra.mxu0 %v1354
        %1372 = vmatprep.subr.bf16.mxu0 0
        %1373 = vmatpush2.bf16.msra.mxu0 0
        %1374 = vmatprep.subr.bf16.mxu0 0
        %1375 = vmatpush2.bf16.msra.mxu0 0
        %1376 = vmatprep.subr.bf16.mxu0 0
        %1377 = vmatpush2.bf16.msra.mxu0 0
        %1378 = vmatprep.subr.bf16.mxu0 0
        %1379 = vmatpush2.bf16.msra.mxu0 0
        %1380 = vmatprep.subr.bf16.mxu0 0
        %1381 = vmatpush2.bf16.msra.mxu0 0
        %1382 = vmatprep.subr.bf16.mxu0 0
        %1383 = vmatpush2.bf16.msra.mxu0 0
        %1384 = vmatprep.subr.bf16.mxu0 0
        %1385 = vmatpush2.bf16.msra.mxu0 0
        %1386 = vmatprep.subr.bf16.mxu0 0
        %1387 = vmatpush2.bf16.msra.mxu0 0
        %1388 = vmatprep.mubr.bf16.mxu0 0
        %1389 = vmatmul.mubr.bf16.gmra.mxu0 %v1351
        %v1390 = vpop.f32.mrf.mxu0
        %v1391 = vadd.f32 0.0, %v1390
        %v1392 = vpop.f32.mrf.mxu0
        %v1393 = vpop.f32.mrf.mxu0
        %v1394 = vpop.f32.mrf.mxu0
        %1395 = vdwg.mxu0
        %v1396 = vpack.c.bf16 %v1391, %v1391
        %v1397 = vld [vmem:[%s10 + $0xc] sm:$0xf]
        %v1399 = vsel %vm810, %v1396, 0
        %v1402 = vsel %vm872, %v1397, 0
        %1404 = vmatprep.subr.bf16.mxu0 0
        %1405 = vmatpush1.bf16.msra.mxu0 0
        %1406 = vmatprep.subr.bf16.mxu0 0
        %1407 = vmatpush1.bf16.msra.mxu0 0
        %1408 = vmatprep.subr.bf16.mxu0 0
        %1409 = vmatpush1.bf16.msra.mxu0 0
        %1410 = vmatprep.subr.bf16.mxu0 0
        %1411 = vmatpush1.bf16.msra.mxu0 0
        %1412 = vmatprep.subr.bf16.mxu0 0
        %1413 = vmatpush1.bf16.msra.mxu0 0
        %1414 = vmatprep.subr.bf16.mxu0 0
        %1415 = vmatpush1.bf16.msra.mxu0 0
        %1416 = vmatprep.subr.bf16.mxu0 0
        %1417 = vmatpush1.bf16.msra.mxu0 0
        %1418 = vmatprep.subr.bf16.mxu0 0
        %1419 = vmatpush1.bf16.msra.mxu0 %v1402
        %1420 = vmatprep.subr.bf16.mxu0 0
        %1421 = vmatpush2.bf16.msra.mxu0 0
        %1422 = vmatprep.subr.bf16.mxu0 0
        %1423 = vmatpush2.bf16.msra.mxu0 0
        %1424 = vmatprep.subr.bf16.mxu0 0
        %1425 = vmatpush2.bf16.msra.mxu0 0
        %1426 = vmatprep.subr.bf16.mxu0 0
        %1427 = vmatpush2.bf16.msra.mxu0 0
        %1428 = vmatprep.subr.bf16.mxu0 0
        %1429 = vmatpush2.bf16.msra.mxu0 0
        %1430 = vmatprep.subr.bf16.mxu0 0
        %1431 = vmatpush2.bf16.msra.mxu0 0
        %1432 = vmatprep.subr.bf16.mxu0 0
        %1433 = vmatpush2.bf16.msra.mxu0 0
        %1434 = vmatprep.subr.bf16.mxu0 0
        %1435 = vmatpush2.bf16.msra.mxu0 0
        %1436 = vmatprep.mubr.bf16.mxu0 0
        %1437 = vmatmul.mubr.bf16.gmra.mxu0 %v1399
        %v1438 = vpop.f32.mrf.mxu0
        %v1439 = vadd.f32 0.0, %v1438
        %v1440 = vpop.f32.mrf.mxu0
        %v1441 = vpop.f32.mrf.mxu0
        %v1442 = vpop.f32.mrf.mxu0
        %1443 = vdwg.mxu0
        %v1444 = vadd.f32 %v1285, %v1439
        %1445 = vst.msk [vmem:[%s592] sm:$0xff] %vm623, %v1444
        %s1446 = sand.u32 %s317, 1
        %s1447 = scalar_lea.sflag [#allocation4], %s1446
        %s1448 = sand.u32 %s317, 1
        %s1449 = smul.addr %s1448, 8
        %s1450 = scalar_lea.vmem [#allocation16], %s1449
        // Predicated region
        $region101: #{tpu_custom_call.1} parent=67 // pred_check
          %p1451 = pneg %p327
        $region102: #{tpu_custom_call.1} parent=67 // pred_check_branch
          %1453 = sbr.rel (%p1451) target = $region104
        $region103: #{tpu_custom_call.1} parent=67 // pred_region
          %s1455 = ssub.s32 128, 128
          %1456 = vsyncadd %s1447, %s1455
          %s1457 = smul.addr %s37, 128
          %s1458 = scalar_lea.hbm %s12, %s1457
          %s1460 = sshll.u32 %s1450, 4
          %s1461 = int_to_ptr.vmem [resolvable:$true] %s1460
          %1463 = dma.vmem_to_hbm [thread:$0]  %s1461, 128, %s1458, %s1447
        $region104: #{tpu_custom_call.1} parent=67 // pred_fallthru
          _
      $region68: #{tpu_custom_call.1} parent=5 // pred_fallthru
        _
      %p1464 = scmp.le.s32.totalorder 2, %s32
      // Predicated region
      $region105: #{tpu_custom_call.1} parent=5 // pred_check
        %p1465 = pneg %p1464
      $region106: #{tpu_custom_call.1} parent=5 // pred_check_branch
        %1467 = sbr.rel (%p1465) target = $region108
      $region107: #{tpu_custom_call.1} parent=5 // pred_region
        %s1468 = ssub.s32 %s32, 2
        // Predicated region
        $region109: #{tpu_custom_call.1} parent=107 // pred_check
          %p1469 = pneg %p333
        $region110: #{tpu_custom_call.1} parent=107 // pred_check_branch
          %1471 = sbr.rel (%p1469) target = $region112
        $region111: #{tpu_custom_call.1} parent=107 // pred_region
          %s1472 = sand.u32 %s318, 1
          %s1473 = scalar_lea.sflag [#allocation4], %s1472
          %s1474 = sand.u32 %s318, 1
          %s1475 = smul.addr %s1474, 8
          %s1476 = scalar_lea.vmem [#allocation16], %s1475
          %1477 = dma.done %s1473, 128
        $region112: #{tpu_custom_call.1} parent=107 // pred_fallthru
          _
      $region108: #{tpu_custom_call.1} parent=5 // pred_fallthru
        _
    $region6: #{tpu_custom_call.1} parent=1 // loop_footer
      %s36 = sadd.s32 1, %s32
    $region7: #{tpu_custom_call.1} parent=1 // loop_footer_branch
      %31 = sbr.rel target = $region3
    $region8: #{tpu_custom_call.1} parent=1 // loop_exit
      _
    %1478 = vsyncpa [#allocation3], 1
    %s1479 = scalar_lea.sflag [#allocation3], 1
    %1480 = vsyncpa %s1479, 1
    %1481 = vsyncpa [#allocation6], 1
    %s1482 = scalar_lea.sflag [#allocation6], 1
    %1483 = vsyncpa %s1482, 1
    %1484 = vsyncpa [#allocation9], 1
    %s1485 = scalar_lea.sflag [#allocation9], 1
    %1486 = vsyncpa %s1485, 1
    %1487 = vsyncpa [#allocation12], 1
    %1488 = vsyncpa [#allocation15], 1
    %1489 = vsyncpa [#allocation4], 1
    %s1490 = scalar_lea.sflag [#allocation4], 1
    %1491 = vsyncpa %s1490, 1

</llo_original>
